<compile_context>
chip_gen: v7x
topology: tpu7x:2x2x1
jax: 0.10.0
libtpu: 0.0.40
codegen_flags: <defaults>
</compile_context>

<pallas_src>
import functools

import jax
import jax.numpy as jnp
from jax.experimental import pallas as pl
from jax.experimental.pallas import tpu as pltpu


# ------------------------------- Pallas kernel -------------------------------

def vq_kernel(x_ref, et_ref, qt_ref, enc_ref, loss_ref, ent_ref, *, commitment):
    # x_ref:   (N, D)  flattened NHWC inputs
    # et_ref:  (D, K)  codebook transposed (lane-dense on K)
    x = x_ref[...]
    e_t = et_ref[...]
    n, d = x.shape
    k = e_t.shape[1]

    # distances[n, k] = ||x_n||^2 + ||e_k||^2 - 2 x_n . e_k   (shape (N, K), K on lanes)
    x_sq = jnp.sum(x * x, axis=1, keepdims=True)                    # (N, 1)
    e_sq = jnp.sum(e_t * e_t, axis=0, keepdims=True)                # (1, K) sublane-reduce
    xe = jnp.dot(x, e_t, preferred_element_type=jnp.float32)        # (N, K) MXU
    dist = x_sq + e_sq - 2.0 * xe

    # argmin(dim=1) with first-index tie-break, built from min + iota (no lax.argmin)
    lane = jax.lax.broadcasted_iota(jnp.int32, dist.shape, 1)       # (N, K)
    min_d = jnp.min(dist, axis=1, keepdims=True)                    # (N, 1)
    idx = jnp.min(jnp.where(dist <= min_d, lane, k), axis=1, keepdims=True)  # (N, 1)

    # one-hot encodings (N, K), lane-dense store
    enc = (lane == idx).astype(jnp.float32)
    enc_ref[...] = enc

    # quantized (transposed, lane-dense): q_T[d, n] = sum_k e_t[d, k] * enc[n, k]
    # NT matmul on the MXU (same dimension_numbers pattern as flash-attention q @ k^T).
    q_t = jax.lax.dot_general(e_t, enc, (((1,), (1,)), ((), ())),
                              preferred_element_type=jnp.float32)   # (D, N)
    qt_ref[...] = q_t

    # commitment loss:  cf * mean((quantized - inputs)^2)
    # Since quantized rows are exact codebook rows, (q_n - x_n)^2 summed over D equals
    # the per-row minimum distance, which we already have.
    loss_ref[...] = (commitment / float(n * d)) * jnp.sum(
        jnp.maximum(min_d, 0.0), keepdims=True)

    # vq entropy of code-usage distribution
    avg = jnp.sum(enc, axis=0, keepdims=True) * (1.0 / float(n))    # (1, K)
    ent_ref[...] = -jnp.sum(avg * jnp.log(avg + 1e-10), keepdims=True)


# ------------------------------ Forward wrapper ------------------------------

def vq_ema_forward(x_nchw, emb_w, commitment_factor=0.25):
    B, C, H, W = x_nchw.shape
    K, D = emb_w.shape
    assert C == D, "embedding_dim must match input channels"
    N = B * H * W

    # glue: NCHW -> NHWC flatten (8 KiB) and a 2 KiB codebook transpose
    x_flat = jnp.transpose(x_nchw, (0, 2, 3, 1)).reshape(N, D)
    e_t = jnp.transpose(emb_w)                                       # (D, K)

    vmem = pl.BlockSpec(memory_space=pltpu.MemorySpace.VMEM)
    q_t, enc, loss, ent = pl.pallas_call(
        functools.partial(vq_kernel, commitment=float(commitment_factor)),
        out_shape=(
            jax.ShapeDtypeStruct((D, N), jnp.float32),   # quantized, transposed
            jax.ShapeDtypeStruct((N, K), jnp.float32),   # encodings
            jax.ShapeDtypeStruct((1, 1), jnp.float32),   # commitment loss
            jax.ShapeDtypeStruct((1, 1), jnp.float32),   # vq entropy
        ),
        in_specs=[vmem, vmem],
        out_specs=(vmem, vmem, vmem, vmem),
        compiler_params=pltpu.CompilerParams(vmem_limit_bytes=16 * 1024 * 1024),
    )(x_flat, e_t)

    # straight-through estimator: forward value == quantized
    quantized_nchw = jnp.transpose(q_t.reshape(D, B, H, W), (1, 0, 2, 3))
    return quantized_nchw, loss[0, 0], ent[0, 0], enc


# -------------------- Pure-JAX reference (PyTorch semantics) -----------------

def vq_ema_ref(x_nchw, emb_w, commitment_factor=0.25):
    hp = jax.lax.Precision.HIGHEST
    x = jnp.transpose(x_nchw, (0, 2, 3, 1))
    B, H, W, D = x.shape
    K = emb_w.shape[0]
    flat = x.reshape(-1, D)
    dist = (jnp.sum(flat ** 2, axis=1, keepdims=True)
            + jnp.sum(emb_w ** 2, axis=1)
            - 2.0 * jnp.dot(flat, emb_w.T, precision=hp))
    idx = jnp.argmin(dist, axis=1)
    enc = jax.nn.one_hot(idx, K, dtype=jnp.float32)
    q = jnp.dot(enc, emb_w, precision=hp).reshape(x.shape)
    e_latent = jnp.mean((q - x) ** 2)
    loss = commitment_factor * e_latent
    q_st = x + (q - x)                       # straight-through (forward value = q)
    avg = jnp.mean(enc, axis=0)
    ent = -jnp.sum(avg * jnp.log(avg + 1e-10))
    return jnp.transpose(q_st, (0, 3, 1, 2)), loss, ent, enc


# ------------------------------------ Main -----------------------------------

if __name__ == "__main__":
    B, C, H, W = 2, 4, 16, 16        # embedding_dim = C = 4
    K = 128                          # num_embeddings

    key = jax.random.PRNGKey(0)
    kx, ke = jax.random.split(key)
    x = jax.random.normal(kx, (B, C, H, W), jnp.float32)
    emb_w = jax.random.normal(ke, (K, C), jnp.float32)   # embedding.weight ~ N(0,1)

    q, loss, ent, enc = vq_ema_forward(x, emb_w)
    q = jax.block_until_ready(q)
    loss = jax.block_until_ready(loss)
    ent = jax.block_until_ready(ent)
    enc = jax.block_until_ready(enc)

    q_r, loss_r, ent_r, enc_r = vq_ema_ref(x, emb_w)

    assert q.shape == (B, C, H, W), q.shape
    assert enc.shape == (B * H * W, K), enc.shape
    assert jnp.allclose(enc, enc_r, atol=0.0), "encodings mismatch"
    assert jnp.allclose(q, q_r, rtol=1e-3, atol=1e-3), "quantized mismatch"
    assert jnp.allclose(loss, loss_r, rtol=1e-3, atol=1e-3), (loss, loss_r)
    assert jnp.allclose(ent, ent_r, rtol=1e-3, atol=1e-3), (ent, ent_r)
    print("KERNEL_OK")
</pallas_src>

<mosaic_0001>
module attributes {stable_mosaic.version = 11 : i64} {
  func.func @vq_kernel(%arg0: memref<512x4xf32, #tpu.memory_space<vmem>>, %arg1: memref<4x128xf32, #tpu.memory_space<vmem>>, %arg2: memref<4x512xf32, #tpu.memory_space<vmem>>, %arg3: memref<512x128xf32, #tpu.memory_space<vmem>>, %arg4: memref<1x1xf32, #tpu.memory_space<vmem>>, %arg5: memref<1x1xf32, #tpu.memory_space<vmem>>) attributes {dimension_semantics = [], scalar_prefetch = 0 : i64, scratch_operands = 0 : i64, tpu.core_type = #tpu.core_type<tc>} {
    %c0 = arith.constant 0 : index
    %c0_0 = arith.constant 0 : index
    %0 = vector.load %arg0[%c0, %c0_0] : memref<512x4xf32, #tpu.memory_space<vmem>>, vector<512x4xf32>
    %c0_1 = arith.constant 0 : index
    %c0_2 = arith.constant 0 : index
    %1 = vector.load %arg1[%c0_1, %c0_2] : memref<4x128xf32, #tpu.memory_space<vmem>>, vector<4x128xf32>
    %2 = arith.mulf %0, %0 : vector<512x4xf32>
    %cst = arith.constant dense<0.000000e+00> : vector<512xf32>
    %3 = vector.multi_reduction <add>, %2, %cst [1] : vector<512x4xf32> to vector<512xf32>
    %4 = vector.shape_cast %3 : vector<512xf32> to vector<512x1xf32>
    %5 = arith.mulf %1, %1 : vector<4x128xf32>
    %cst_3 = arith.constant dense<0.000000e+00> : vector<128xf32>
    %6 = vector.multi_reduction <add>, %5, %cst_3 [0] : vector<4x128xf32> to vector<128xf32>
    %7 = vector.shape_cast %6 : vector<128xf32> to vector<1x128xf32>
    %cst_4 = arith.constant dense<0.000000e+00> : vector<512x128xf32>
    %8 = tpu.matmul %0, %1, %cst_4 {dimension_numbers = #tpu.dot_dimension_numbers<[1], [0], [0], [1], [0, 0, 1, 1], [], []>} : vector<512x4xf32>, vector<4x128xf32>, vector<512x128xf32> -> vector<512x128xf32>
    %9 = vector.broadcast %4 : vector<512x1xf32> to vector<512x128xf32>
    %10 = vector.broadcast %7 : vector<1x128xf32> to vector<512x128xf32>
    %11 = arith.addf %9, %10 : vector<512x128xf32>
    %cst_5 = arith.constant 2.000000e+00 : f32
    %12 = vector.broadcast %cst_5 : f32 to vector<512x128xf32>
    %13 = arith.mulf %12, %8 : vector<512x128xf32>
    %14 = arith.subf %11, %13 : vector<512x128xf32>
    %15 = tpu.iota {dimensions = array<i32: 1>} : vector<512x128xi32>
    %cst_6 = arith.constant dense<0x7F800000> : vector<512xf32>
    %16 = vector.multi_reduction <minimumf>, %14, %cst_6 [1] : vector<512x128xf32> to vector<512xf32>
    %17 = vector.shape_cast %16 : vector<512xf32> to vector<512x1xf32>
    %18 = vector.broadcast %17 : vector<512x1xf32> to vector<512x128xf32>
    %19 = arith.cmpf ole, %14, %18 : vector<512x128xf32>
    %c128_i32 = arith.constant 128 : i32
    %20 = vector.broadcast %c128_i32 : i32 to vector<512x128xi32>
    %21 = arith.select %19, %15, %20 : vector<512x128xi1>, vector<512x128xi32>
    %cst_7 = arith.constant dense<2147483647> : vector<512xi32>
    %22 = vector.multi_reduction <minsi>, %21, %cst_7 [1] : vector<512x128xi32> to vector<512xi32>
    %23 = vector.shape_cast %22 : vector<512xi32> to vector<512x1xi32>
    %24 = vector.broadcast %23 : vector<512x1xi32> to vector<512x128xi32>
    %25 = arith.cmpi eq, %15, %24 : vector<512x128xi32>
    %26 = arith.extui %25 : vector<512x128xi1> to vector<512x128xi32>
    %27 = arith.sitofp %26 : vector<512x128xi32> to vector<512x128xf32>
    %c0_8 = arith.constant 0 : index
    %c0_9 = arith.constant 0 : index
    %28 = vector.load %arg3[%c0_8, %c0_9] : memref<512x128xf32, #tpu.memory_space<vmem>>, vector<512x128xf32>
    tpu.vector_store %arg3[%c0_8, %c0_9], %27 {strides = array<i32>} : memref<512x128xf32, #tpu.memory_space<vmem>>, vector<512x128xf32>,
    %cst_10 = arith.constant dense<0.000000e+00> : vector<4x512xf32>
    %29 = tpu.matmul %1, %27, %cst_10 {dimension_numbers = #tpu.dot_dimension_numbers<[1], [1], [0], [0], [0, 0, 1, 0], [], []>} : vector<4x128xf32>, vector<512x128xf32>, vector<4x512xf32> -> vector<4x512xf32>
    %c0_11 = arith.constant 0 : index
    %c0_12 = arith.constant 0 : index
    %30 = vector.load %arg2[%c0_11, %c0_12] : memref<4x512xf32, #tpu.memory_space<vmem>>, vector<4x512xf32>
    tpu.vector_store %arg2[%c0_11, %c0_12], %29 {strides = array<i32>} : memref<4x512xf32, #tpu.memory_space<vmem>>, vector<4x512xf32>,
    %cst_13 = arith.constant 0.000000e+00 : f32
    %31 = vector.broadcast %cst_13 : f32 to vector<512x1xf32>
    %32 = arith.maximumf %17, %31 : vector<512x1xf32>
    %33 = vector.shape_cast %32 : vector<512x1xf32> to vector<1x512x1xf32>
    %cst_14 = arith.constant dense<0.000000e+00> : vector<1xf32>
    %34 = vector.multi_reduction <add>, %33, %cst_14 [1, 2] : vector<1x512x1xf32> to vector<1xf32>
    %35 = vector.shape_cast %34 : vector<1xf32> to vector<1x1x1xf32>
    %36 = vector.extract %35[0, 0, 0] : f32 from vector<1x1x1xf32>
    %37 = vector.broadcast %36 : f32 to vector<1x1xf32>
    %cst_15 = arith.constant 1.22070313E-4 : f32
    %38 = vector.broadcast %cst_15 : f32 to vector<1x1xf32>
    %39 = arith.mulf %38, %37 : vector<1x1xf32>
    %c0_16 = arith.constant 0 : index
    %c0_17 = arith.constant 0 : index
    %40 = vector.load %arg4[%c0_16, %c0_17] : memref<1x1xf32, #tpu.memory_space<vmem>>, vector<1x1xf32>
    tpu.vector_store %arg4[%c0_16, %c0_17], %39 {strides = array<i32>} : memref<1x1xf32, #tpu.memory_space<vmem>>, vector<1x1xf32>,
    %cst_18 = arith.constant dense<0.000000e+00> : vector<128xf32>
    %41 = vector.multi_reduction <add>, %27, %cst_18 [0] : vector<512x128xf32> to vector<128xf32>
    %42 = vector.shape_cast %41 : vector<128xf32> to vector<1x128xf32>
    %cst_19 = arith.constant 0.001953125 : f32
    %43 = vector.broadcast %cst_19 : f32 to vector<1x128xf32>
    %44 = arith.mulf %42, %43 : vector<1x128xf32>
    %cst_20 = arith.constant 1.000000e-10 : f32
    %45 = vector.broadcast %cst_20 : f32 to vector<1x128xf32>
    %46 = arith.addf %44, %45 : vector<1x128xf32>
    %47 = math.log %46 : vector<1x128xf32>
    %48 = arith.mulf %44, %47 : vector<1x128xf32>
    %49 = vector.shape_cast %48 : vector<1x128xf32> to vector<1x1x128xf32>
    %cst_21 = arith.constant dense<0.000000e+00> : vector<1xf32>
    %50 = vector.multi_reduction <add>, %49, %cst_21 [1, 2] : vector<1x1x128xf32> to vector<1xf32>
    %51 = vector.shape_cast %50 : vector<1xf32> to vector<1x1x1xf32>
    %52 = vector.extract %51[0, 0, 0] : f32 from vector<1x1x1xf32>
    %53 = vector.broadcast %52 : f32 to vector<1x1xf32>
    %cst_22 = arith.constant 0.000000e+00 : f32
    %54 = vector.broadcast %cst_22 : f32 to vector<1x1xf32>
    %55 = arith.subf %54, %53 : vector<1x1xf32>
    %c0_23 = arith.constant 0 : index
    %c0_24 = arith.constant 0 : index
    %56 = vector.load %arg5[%c0_23, %c0_24] : memref<1x1xf32, #tpu.memory_space<vmem>>, vector<1x1xf32>
    tpu.vector_store %arg5[%c0_23, %c0_24], %55 {strides = array<i32>} : memref<1x1xf32, #tpu.memory_space<vmem>>, vector<1x1xf32>,
    return
  }
}

</mosaic_0001>

<llo_original>
// kernel: tpu_custom_call.1
$region0: #{tpu_custom_call.1}
  #allocation0 [shape = 'u32[]', space=smem, size = 0x4, offset = 0x4, fixed_abs, tag = 'smem constant byte address 0x4 - core index']
  #allocation1 [shape = 'u32[144,128]{1,0:T(1,128)}', space=vmem, size = 0x12000, scoped, tag = 'internal scratch']
  %s0 = inlined_call_operand.vmem [shape: f32[512,4], index: 0, kind: input, shape index: {}]
  %s1 = inlined_call_operand.vmem [shape: f32[4,128], index: 1, kind: input, shape index: {}]
  %s2 = inlined_call_operand.hbm [shape: f32[4,512], index: 2, kind: output, shape index: {0}]
  %s3 = inlined_call_operand.hbm [shape: f32[512,128], index: 3, kind: output, shape index: {1}]
  %s4 = inlined_call_operand.hbm [shape: f32[1,1], index: 4, kind: output, shape index: {2}]
  %s5 = inlined_call_operand.hbm [shape: f32[1,1], index: 5, kind: output, shape index: {3}]
  %6 = xla_tuple %s2, %s3, %s4, %s5
  %s7 = sld [smem:[#allocation0]]
  $region42: #{tpu_custom_call.1} parent=0
    _
  %s9 = ssub.s32 1, %s7
  %s10 = scalar_select 0, %s9, %s7
  $region1: #{tpu_custom_call.1} parent=0
    #allocation2 [shape = 'u8[8192]{0}', space=vmem, size = 0x2000, scoped, tag = 'output window, operand 0, single buffered']
    #allocation3 [shape = 's32[1]{0}', space=sflag, size = 0x4, scoped, tag = 'scoped memory for tpu_custom_call.1']
    #allocation4 [shape = 'u8[262144]{0}', space=vmem, size = 0x40000, scoped, tag = 'output window, operand 1, single buffered']
    #allocation5 [shape = 's32[1]{0}', space=sflag, size = 0x4, scoped, tag = 'scoped memory for tpu_custom_call.1']
    #allocation6 [shape = 'u8[512]{0}', space=vmem, size = 0x400, scoped, tag = 'output window, operand 2, single buffered']
    #allocation7 [shape = 'u8[512]{0}', space=vmem, size = 0x400, scoped, tag = 'output window, operand 3, single buffered']
    #allocation8 [shape = 's32[1]{0}', space=sflag, size = 0x4, scoped, tag = 'scoped memory for tpu_custom_call.1']
    %11 = vsyncpa [#allocation3], 0
    %12 = vsyncpa [#allocation5], 0
    %13 = vsyncpa [#allocation8], 0
    // Predicated region
    $region2: #{tpu_custom_call.1} parent=1 // pred_check
      _
    $region3: #{tpu_custom_call.1} parent=1 // pred_check_branch
      %15 = sbr.rel (0) target = $region5
    $region4: #{tpu_custom_call.1} parent=1 // pred_region
      _
    $region5: #{tpu_custom_call.1} parent=1 // pred_fallthru
      _
    // Predicated region
    $region6: #{tpu_custom_call.1} parent=1 // pred_check
      _
    $region7: #{tpu_custom_call.1} parent=1 // pred_check_branch
      %17 = sbr.rel (0) target = $region9
    $region8: #{tpu_custom_call.1} parent=1 // pred_region
      _
    $region9: #{tpu_custom_call.1} parent=1 // pred_fallthru
      _
    %v18 = vld [vmem:[%s0] sm:$0xff]
    %v19 = vld [vmem:[%s0 + $0x8] sm:$0xff]
    %v20 = vld [vmem:[%s0 + $0x10] sm:$0xff]
    %v21 = vld [vmem:[%s0 + $0x18] sm:$0xff]
    %v22 = vld [vmem:[%s0 + $0x20] sm:$0xff]
    %v23 = vld [vmem:[%s0 + $0x28] sm:$0xff]
    %v24 = vld [vmem:[%s0 + $0x30] sm:$0xff]
    %v25 = vld [vmem:[%s0 + $0x38] sm:$0xff]
    %v26 = vld [vmem:[%s0 + $0x40] sm:$0xff]
    %v27 = vld [vmem:[%s0 + $0x48] sm:$0xff]
    %v28 = vld [vmem:[%s0 + $0x50] sm:$0xff]
    %v29 = vld [vmem:[%s0 + $0x58] sm:$0xff]
    %v30 = vld [vmem:[%s0 + $0x60] sm:$0xff]
    %v31 = vld [vmem:[%s0 + $0x68] sm:$0xff]
    %v32 = vld [vmem:[%s0 + $0x70] sm:$0xff]
    %v33 = vld [vmem:[%s0 + $0x78] sm:$0xff]
    %v34 = vld [vmem:[%s0 + $0x80] sm:$0xff]
    %v35 = vld [vmem:[%s0 + $0x88] sm:$0xff]
    %v36 = vld [vmem:[%s0 + $0x90] sm:$0xff]
    %v37 = vld [vmem:[%s0 + $0x98] sm:$0xff]
    %v38 = vld [vmem:[%s0 + $0xa0] sm:$0xff]
    %v39 = vld [vmem:[%s0 + $0xa8] sm:$0xff]
    %v40 = vld [vmem:[%s0 + $0xb0] sm:$0xff]
    %v41 = vld [vmem:[%s0 + $0xb8] sm:$0xff]
    %v42 = vld [vmem:[%s0 + $0xc0] sm:$0xff]
    %v43 = vld [vmem:[%s0 + $0xc8] sm:$0xff]
    %v44 = vld [vmem:[%s0 + $0xd0] sm:$0xff]
    %v45 = vld [vmem:[%s0 + $0xd8] sm:$0xff]
    %v46 = vld [vmem:[%s0 + $0xe0] sm:$0xff]
    %v47 = vld [vmem:[%s0 + $0xe8] sm:$0xff]
    %v48 = vld [vmem:[%s0 + $0xf0] sm:$0xff]
    %v49 = vld [vmem:[%s0 + $0xf8] sm:$0xff]
    %v50 = vld [vmem:[%s0 + $0x100] sm:$0xff]
    %v51 = vld [vmem:[%s0 + $0x108] sm:$0xff]
    %v52 = vld [vmem:[%s0 + $0x110] sm:$0xff]
    %v53 = vld [vmem:[%s0 + $0x118] sm:$0xff]
    %v54 = vld [vmem:[%s0 + $0x120] sm:$0xff]
    %v55 = vld [vmem:[%s0 + $0x128] sm:$0xff]
    %v56 = vld [vmem:[%s0 + $0x130] sm:$0xff]
    %v57 = vld [vmem:[%s0 + $0x138] sm:$0xff]
    %v58 = vld [vmem:[%s0 + $0x140] sm:$0xff]
    %v59 = vld [vmem:[%s0 + $0x148] sm:$0xff]
    %v60 = vld [vmem:[%s0 + $0x150] sm:$0xff]
    %v61 = vld [vmem:[%s0 + $0x158] sm:$0xff]
    %v62 = vld [vmem:[%s0 + $0x160] sm:$0xff]
    %v63 = vld [vmem:[%s0 + $0x168] sm:$0xff]
    %v64 = vld [vmem:[%s0 + $0x170] sm:$0xff]
    %v65 = vld [vmem:[%s0 + $0x178] sm:$0xff]
    %v66 = vld [vmem:[%s0 + $0x180] sm:$0xff]
    %v67 = vld [vmem:[%s0 + $0x188] sm:$0xff]
    %v68 = vld [vmem:[%s0 + $0x190] sm:$0xff]
    %v69 = vld [vmem:[%s0 + $0x198] sm:$0xff]
    %v70 = vld [vmem:[%s0 + $0x1a0] sm:$0xff]
    %v71 = vld [vmem:[%s0 + $0x1a8] sm:$0xff]
    %v72 = vld [vmem:[%s0 + $0x1b0] sm:$0xff]
    %v73 = vld [vmem:[%s0 + $0x1b8] sm:$0xff]
    %v74 = vld [vmem:[%s0 + $0x1c0] sm:$0xff]
    %v75 = vld [vmem:[%s0 + $0x1c8] sm:$0xff]
    %v76 = vld [vmem:[%s0 + $0x1d0] sm:$0xff]
    %v77 = vld [vmem:[%s0 + $0x1d8] sm:$0xff]
    %v78 = vld [vmem:[%s0 + $0x1e0] sm:$0xff]
    %v79 = vld [vmem:[%s0 + $0x1e8] sm:$0xff]
    %v80 = vld [vmem:[%s0 + $0x1f0] sm:$0xff]
    %v81 = vld [vmem:[%s0 + $0x1f8] sm:$0xff]
    %v82 = vld [vmem:[%s1] sm:$0xf]
    %v83 = vmul.f32 %v18, %v18
    %v84 = vmul.f32 %v19, %v19
    %v85 = vmul.f32 %v20, %v20
    %v86 = vmul.f32 %v21, %v21
    %v87 = vmul.f32 %v22, %v22
    %v88 = vmul.f32 %v23, %v23
    %v89 = vmul.f32 %v24, %v24
    %v90 = vmul.f32 %v25, %v25
    %v91 = vmul.f32 %v26, %v26
    %v92 = vmul.f32 %v27, %v27
    %v93 = vmul.f32 %v28, %v28
    %v94 = vmul.f32 %v29, %v29
    %v95 = vmul.f32 %v30, %v30
    %v96 = vmul.f32 %v31, %v31
    %v97 = vmul.f32 %v32, %v32
    %v98 = vmul.f32 %v33, %v33
    %v99 = vmul.f32 %v34, %v34
    %v100 = vmul.f32 %v35, %v35
    %v101 = vmul.f32 %v36, %v36
    %v102 = vmul.f32 %v37, %v37
    %v103 = vmul.f32 %v38, %v38
    %v104 = vmul.f32 %v39, %v39
    %v105 = vmul.f32 %v40, %v40
    %v106 = vmul.f32 %v41, %v41
    %v107 = vmul.f32 %v42, %v42
    %v108 = vmul.f32 %v43, %v43
    %v109 = vmul.f32 %v44, %v44
    %v110 = vmul.f32 %v45, %v45
    %v111 = vmul.f32 %v46, %v46
    %v112 = vmul.f32 %v47, %v47
    %v113 = vmul.f32 %v48, %v48
    %v114 = vmul.f32 %v49, %v49
    %v115 = vmul.f32 %v50, %v50
    %v116 = vmul.f32 %v51, %v51
    %v117 = vmul.f32 %v52, %v52
    %v118 = vmul.f32 %v53, %v53
    %v119 = vmul.f32 %v54, %v54
    %v120 = vmul.f32 %v55, %v55
    %v121 = vmul.f32 %v56, %v56
    %v122 = vmul.f32 %v57, %v57
    %v123 = vmul.f32 %v58, %v58
    %v124 = vmul.f32 %v59, %v59
    %v125 = vmul.f32 %v60, %v60
    %v126 = vmul.f32 %v61, %v61
    %v127 = vmul.f32 %v62, %v62
    %v128 = vmul.f32 %v63, %v63
    %v129 = vmul.f32 %v64, %v64
    %v130 = vmul.f32 %v65, %v65
    %v131 = vmul.f32 %v66, %v66
    %v132 = vmul.f32 %v67, %v67
    %v133 = vmul.f32 %v68, %v68
    %v134 = vmul.f32 %v69, %v69
    %v135 = vmul.f32 %v70, %v70
    %v136 = vmul.f32 %v71, %v71
    %v137 = vmul.f32 %v72, %v72
    %v138 = vmul.f32 %v73, %v73
    %v139 = vmul.f32 %v74, %v74
    %v140 = vmul.f32 %v75, %v75
    %v141 = vmul.f32 %v76, %v76
    %v142 = vmul.f32 %v77, %v77
    %v143 = vmul.f32 %v78, %v78
    %v144 = vmul.f32 %v79, %v79
    %v145 = vmul.f32 %v80, %v80
    %v146 = vmul.f32 %v81, %v81
    %vm147 = vcmask 31744
    %v148 = vsel %vm147, %v83, 0.0
    %149 = vadd.xlane.f32.xlu0 %v148
    %v150 = vpop.xlane.xlu0 %149
    %v151 = vsel %vm147, %v84, 0.0
    %152 = vadd.xlane.f32.xlu0 %v151
    %v153 = vpop.xlane.xlu0 %152
    %v154 = vsel %vm147, %v85, 0.0
    %155 = vadd.xlane.f32.xlu0 %v154
    %v156 = vpop.xlane.xlu0 %155
    %v157 = vsel %vm147, %v86, 0.0
    %158 = vadd.xlane.f32.xlu0 %v157
    %v159 = vpop.xlane.xlu0 %158
    %v160 = vsel %vm147, %v87, 0.0
    %161 = vadd.xlane.f32.xlu0 %v160
    %v162 = vpop.xlane.xlu0 %161
    %v163 = vsel %vm147, %v88, 0.0
    %164 = vadd.xlane.f32.xlu0 %v163
    %v165 = vpop.xlane.xlu0 %164
    %v166 = vsel %vm147, %v89, 0.0
    %167 = vadd.xlane.f32.xlu0 %v166
    %v168 = vpop.xlane.xlu0 %167
    %v169 = vsel %vm147, %v90, 0.0
    %170 = vadd.xlane.f32.xlu0 %v169
    %v171 = vpop.xlane.xlu0 %170
    %v172 = vsel %vm147, %v91, 0.0
    %173 = vadd.xlane.f32.xlu0 %v172
    %v174 = vpop.xlane.xlu0 %173
    %v175 = vsel %vm147, %v92, 0.0
    %176 = vadd.xlane.f32.xlu0 %v175
    %v177 = vpop.xlane.xlu0 %176
    %v178 = vsel %vm147, %v93, 0.0
    %179 = vadd.xlane.f32.xlu0 %v178
    %v180 = vpop.xlane.xlu0 %179
    %v181 = vsel %vm147, %v94, 0.0
    %182 = vadd.xlane.f32.xlu0 %v181
    %v183 = vpop.xlane.xlu0 %182
    %v184 = vsel %vm147, %v95, 0.0
    %185 = vadd.xlane.f32.xlu0 %v184
    %v186 = vpop.xlane.xlu0 %185
    %v187 = vsel %vm147, %v96, 0.0
    %188 = vadd.xlane.f32.xlu0 %v187
    %v189 = vpop.xlane.xlu0 %188
    %v190 = vsel %vm147, %v97, 0.0
    %191 = vadd.xlane.f32.xlu0 %v190
    %v192 = vpop.xlane.xlu0 %191
    %v193 = vsel %vm147, %v98, 0.0
    %194 = vadd.xlane.f32.xlu0 %v193
    %v195 = vpop.xlane.xlu0 %194
    %v196 = vsel %vm147, %v99, 0.0
    %197 = vadd.xlane.f32.xlu0 %v196
    %v198 = vpop.xlane.xlu0 %197
    %v199 = vsel %vm147, %v100, 0.0
    %200 = vadd.xlane.f32.xlu0 %v199
    %v201 = vpop.xlane.xlu0 %200
    %v202 = vsel %vm147, %v101, 0.0
    %203 = vadd.xlane.f32.xlu0 %v202
    %v204 = vpop.xlane.xlu0 %203
    %v205 = vsel %vm147, %v102, 0.0
    %206 = vadd.xlane.f32.xlu0 %v205
    %v207 = vpop.xlane.xlu0 %206
    %v208 = vsel %vm147, %v103, 0.0
    %209 = vadd.xlane.f32.xlu0 %v208
    %v210 = vpop.xlane.xlu0 %209
    %v211 = vsel %vm147, %v104, 0.0
    %212 = vadd.xlane.f32.xlu0 %v211
    %v213 = vpop.xlane.xlu0 %212
    %v214 = vsel %vm147, %v105, 0.0
    %215 = vadd.xlane.f32.xlu0 %v214
    %v216 = vpop.xlane.xlu0 %215
    %v217 = vsel %vm147, %v106, 0.0
    %218 = vadd.xlane.f32.xlu0 %v217
    %v219 = vpop.xlane.xlu0 %218
    %v220 = vsel %vm147, %v107, 0.0
    %221 = vadd.xlane.f32.xlu0 %v220
    %v222 = vpop.xlane.xlu0 %221
    %v223 = vsel %vm147, %v108, 0.0
    %224 = vadd.xlane.f32.xlu0 %v223
    %v225 = vpop.xlane.xlu0 %224
    %v226 = vsel %vm147, %v109, 0.0
    %227 = vadd.xlane.f32.xlu0 %v226
    %v228 = vpop.xlane.xlu0 %227
    %v229 = vsel %vm147, %v110, 0.0
    %230 = vadd.xlane.f32.xlu0 %v229
    %v231 = vpop.xlane.xlu0 %230
    %v232 = vsel %vm147, %v111, 0.0
    %233 = vadd.xlane.f32.xlu0 %v232
    %v234 = vpop.xlane.xlu0 %233
    %v235 = vsel %vm147, %v112, 0.0
    %236 = vadd.xlane.f32.xlu0 %v235
    %v237 = vpop.xlane.xlu0 %236
    %v238 = vsel %vm147, %v113, 0.0
    %239 = vadd.xlane.f32.xlu0 %v238
    %v240 = vpop.xlane.xlu0 %239
    %v241 = vsel %vm147, %v114, 0.0
    %242 = vadd.xlane.f32.xlu0 %v241
    %v243 = vpop.xlane.xlu0 %242
    %v244 = vsel %vm147, %v115, 0.0
    %245 = vadd.xlane.f32.xlu0 %v244
    %v246 = vpop.xlane.xlu0 %245
    %v247 = vsel %vm147, %v116, 0.0
    %248 = vadd.xlane.f32.xlu0 %v247
    %v249 = vpop.xlane.xlu0 %248
    %v250 = vsel %vm147, %v117, 0.0
    %251 = vadd.xlane.f32.xlu0 %v250
    %v252 = vpop.xlane.xlu0 %251
    %v253 = vsel %vm147, %v118, 0.0
    %254 = vadd.xlane.f32.xlu0 %v253
    %v255 = vpop.xlane.xlu0 %254
    %v256 = vsel %vm147, %v119, 0.0
    %257 = vadd.xlane.f32.xlu0 %v256
    %v258 = vpop.xlane.xlu0 %257
    %v259 = vsel %vm147, %v120, 0.0
    %260 = vadd.xlane.f32.xlu0 %v259
    %v261 = vpop.xlane.xlu0 %260
    %v262 = vsel %vm147, %v121, 0.0
    %263 = vadd.xlane.f32.xlu0 %v262
    %v264 = vpop.xlane.xlu0 %263
    %v265 = vsel %vm147, %v122, 0.0
    %266 = vadd.xlane.f32.xlu0 %v265
    %v267 = vpop.xlane.xlu0 %266
    %v268 = vsel %vm147, %v123, 0.0
    %269 = vadd.xlane.f32.xlu0 %v268
    %v270 = vpop.xlane.xlu0 %269
    %v271 = vsel %vm147, %v124, 0.0
    %272 = vadd.xlane.f32.xlu0 %v271
    %v273 = vpop.xlane.xlu0 %272
    %v274 = vsel %vm147, %v125, 0.0
    %275 = vadd.xlane.f32.xlu0 %v274
    %v276 = vpop.xlane.xlu0 %275
    %v277 = vsel %vm147, %v126, 0.0
    %278 = vadd.xlane.f32.xlu0 %v277
    %v279 = vpop.xlane.xlu0 %278
    %v280 = vsel %vm147, %v127, 0.0
    %281 = vadd.xlane.f32.xlu0 %v280
    %v282 = vpop.xlane.xlu0 %281
    %v283 = vsel %vm147, %v128, 0.0
    %284 = vadd.xlane.f32.xlu0 %v283
    %v285 = vpop.xlane.xlu0 %284
    %v286 = vsel %vm147, %v129, 0.0
    %287 = vadd.xlane.f32.xlu0 %v286
    %v288 = vpop.xlane.xlu0 %287
    %v289 = vsel %vm147, %v130, 0.0
    %290 = vadd.xlane.f32.xlu0 %v289
    %v291 = vpop.xlane.xlu0 %290
    %v292 = vsel %vm147, %v131, 0.0
    %293 = vadd.xlane.f32.xlu0 %v292
    %v294 = vpop.xlane.xlu0 %293
    %v295 = vsel %vm147, %v132, 0.0
    %296 = vadd.xlane.f32.xlu0 %v295
    %v297 = vpop.xlane.xlu0 %296
    %v298 = vsel %vm147, %v133, 0.0
    %299 = vadd.xlane.f32.xlu0 %v298
    %v300 = vpop.xlane.xlu0 %299
    %v301 = vsel %vm147, %v134, 0.0
    %302 = vadd.xlane.f32.xlu0 %v301
    %v303 = vpop.xlane.xlu0 %302
    %v304 = vsel %vm147, %v135, 0.0
    %305 = vadd.xlane.f32.xlu0 %v304
    %v306 = vpop.xlane.xlu0 %305
    %v307 = vsel %vm147, %v136, 0.0
    %308 = vadd.xlane.f32.xlu0 %v307
    %v309 = vpop.xlane.xlu0 %308
    %v310 = vsel %vm147, %v137, 0.0
    %311 = vadd.xlane.f32.xlu0 %v310
    %v312 = vpop.xlane.xlu0 %311
    %v313 = vsel %vm147, %v138, 0.0
    %314 = vadd.xlane.f32.xlu0 %v313
    %v315 = vpop.xlane.xlu0 %314
    %v316 = vsel %vm147, %v139, 0.0
    %317 = vadd.xlane.f32.xlu0 %v316
    %v318 = vpop.xlane.xlu0 %317
    %v319 = vsel %vm147, %v140, 0.0
    %320 = vadd.xlane.f32.xlu0 %v319
    %v321 = vpop.xlane.xlu0 %320
    %v322 = vsel %vm147, %v141, 0.0
    %323 = vadd.xlane.f32.xlu0 %v322
    %v324 = vpop.xlane.xlu0 %323
    %v325 = vsel %vm147, %v142, 0.0
    %326 = vadd.xlane.f32.xlu0 %v325
    %v327 = vpop.xlane.xlu0 %326
    %v328 = vsel %vm147, %v143, 0.0
    %329 = vadd.xlane.f32.xlu0 %v328
    %v330 = vpop.xlane.xlu0 %329
    %v331 = vsel %vm147, %v144, 0.0
    %332 = vadd.xlane.f32.xlu0 %v331
    %v333 = vpop.xlane.xlu0 %332
    %v334 = vsel %vm147, %v145, 0.0
    %335 = vadd.xlane.f32.xlu0 %v334
    %v336 = vpop.xlane.xlu0 %335
    %v337 = vsel %vm147, %v146, 0.0
    %338 = vadd.xlane.f32.xlu0 %v337
    %v339 = vpop.xlane.xlu0 %338
    %v340 = vmul.f32 %v82, %v82
    %vm341 = vcmask 1043456
    %v342 = vsel %vm341, %v340, 0.0
    %v343 = vrot.slane %v342, 4
    %v344 = vadd.f32 %v342, %v343
    %v345 = vrot.slane %v344, 2
    %v346 = vadd.f32 %v344, %v345
    %v347 = vrot.slane %v346, 1
    %v348 = vadd.f32 %v346, %v347
    %v350 = vsel %vm147, %v18, 0
    %v353 = vsel %vm147, %v19, 0
    %v356 = vsel %vm147, %v20, 0
    %v359 = vsel %vm147, %v21, 0
    %v362 = vsel %vm147, %v22, 0
    %v365 = vsel %vm147, %v23, 0
    %v368 = vsel %vm147, %v24, 0
    %v371 = vsel %vm147, %v25, 0
    %v374 = vsel %vm147, %v26, 0
    %v377 = vsel %vm147, %v27, 0
    %v380 = vsel %vm147, %v28, 0
    %v383 = vsel %vm147, %v29, 0
    %v386 = vsel %vm147, %v30, 0
    %v389 = vsel %vm147, %v31, 0
    %v392 = vsel %vm147, %v32, 0
    %v395 = vsel %vm147, %v33, 0
    %v398 = vsel %vm147, %v34, 0
    %v401 = vsel %vm147, %v35, 0
    %v404 = vsel %vm147, %v36, 0
    %v407 = vsel %vm147, %v37, 0
    %v410 = vsel %vm147, %v38, 0
    %v413 = vsel %vm147, %v39, 0
    %v416 = vsel %vm147, %v40, 0
    %v419 = vsel %vm147, %v41, 0
    %v422 = vsel %vm147, %v42, 0
    %v425 = vsel %vm147, %v43, 0
    %v428 = vsel %vm147, %v44, 0
    %v431 = vsel %vm147, %v45, 0
    %v434 = vsel %vm147, %v46, 0
    %v437 = vsel %vm147, %v47, 0
    %v440 = vsel %vm147, %v48, 0
    %v443 = vsel %vm147, %v49, 0
    %v446 = vsel %vm147, %v50, 0
    %v449 = vsel %vm147, %v51, 0
    %v452 = vsel %vm147, %v52, 0
    %v455 = vsel %vm147, %v53, 0
    %v458 = vsel %vm147, %v54, 0
    %v461 = vsel %vm147, %v55, 0
    %v464 = vsel %vm147, %v56, 0
    %v467 = vsel %vm147, %v57, 0
    %v470 = vsel %vm147, %v58, 0
    %v473 = vsel %vm147, %v59, 0
    %v476 = vsel %vm147, %v60, 0
    %v479 = vsel %vm147, %v61, 0
    %v482 = vsel %vm147, %v62, 0
    %v485 = vsel %vm147, %v63, 0
    %v488 = vsel %vm147, %v64, 0
    %v491 = vsel %vm147, %v65, 0
    %v494 = vsel %vm147, %v66, 0
    %v497 = vsel %vm147, %v67, 0
    %v500 = vsel %vm147, %v68, 0
    %v503 = vsel %vm147, %v69, 0
    %v506 = vsel %vm147, %v70, 0
    %v509 = vsel %vm147, %v71, 0
    %v512 = vsel %vm147, %v72, 0
    %v515 = vsel %vm147, %v73, 0
    %v518 = vsel %vm147, %v74, 0
    %v521 = vsel %vm147, %v75, 0
    %v524 = vsel %vm147, %v76, 0
    %v527 = vsel %vm147, %v77, 0
    %v530 = vsel %vm147, %v78, 0
    %v533 = vsel %vm147, %v79, 0
    %v536 = vsel %vm147, %v80, 0
    %v539 = vsel %vm147, %v81, 0
    %v542 = vsel %vm341, %v82, 0
    %544 = vmatprep.subr.mxu0 0.0
    %545 = vmatpush1.msra.mxu0 %v542
    %546 = vmatprep.subr.mxu0 0.0
    %547 = vmatpush1.msra.mxu0 0.0
    %548 = vmatprep.subr.mxu0 0.0
    %549 = vmatpush1.msra.mxu0 0.0
    %550 = vmatprep.subr.mxu0 0.0
    %551 = vmatpush1.msra.mxu0 0.0
    %552 = vmatprep.subr.mxu0 0.0
    %553 = vmatpush1.msra.mxu0 0.0
    %554 = vmatprep.subr.mxu0 0.0
    %555 = vmatpush1.msra.mxu0 0.0
    %556 = vmatprep.subr.mxu0 0.0
    %557 = vmatpush1.msra.mxu0 0.0
    %558 = vmatprep.subr.mxu0 0.0
    %559 = vmatpush1.msra.mxu0 0.0
    %560 = vmatprep.subr.mxu0 0.0
    %561 = vmatpush1.msra.mxu0 0.0
    %562 = vmatprep.subr.mxu0 0.0
    %563 = vmatpush1.msra.mxu0 0.0
    %564 = vmatprep.subr.mxu0 0.0
    %565 = vmatpush1.msra.mxu0 0.0
    %566 = vmatprep.subr.mxu0 0.0
    %567 = vmatpush1.msra.mxu0 0.0
    %568 = vmatprep.subr.mxu0 0.0
    %569 = vmatpush1.msra.mxu0 0.0
    %570 = vmatprep.subr.mxu0 0.0
    %571 = vmatpush1.msra.mxu0 0.0
    %572 = vmatprep.subr.mxu0 0.0
    %573 = vmatpush1.msra.mxu0 0.0
    %574 = vmatprep.subr.mxu0 0.0
    %575 = vmatpush1.msra.mxu0 0.0
    %576 = vmatprep.subr.mxu0 0.0
    %577 = vmatpush1.msra.mxu0 0.0
    %578 = vmatprep.subr.mxu0 0.0
    %579 = vmatpush1.msra.mxu0 0.0
    %580 = vmatprep.subr.mxu0 0.0
    %581 = vmatpush1.msra.mxu0 0.0
    %582 = vmatprep.subr.mxu0 0.0
    %583 = vmatpush1.msra.mxu0 0.0
    %584 = vmatprep.subr.mxu0 0.0
    %585 = vmatpush1.msra.mxu0 0.0
    %586 = vmatprep.subr.mxu0 0.0
    %587 = vmatpush1.msra.mxu0 0.0
    %588 = vmatprep.subr.mxu0 0.0
    %589 = vmatpush1.msra.mxu0 0.0
    %590 = vmatprep.subr.mxu0 0.0
    %591 = vmatpush1.msra.mxu0 0.0
    %592 = vmatprep.subr.mxu0 0.0
    %593 = vmatpush1.msra.mxu0 0.0
    %594 = vmatprep.subr.mxu0 0.0
    %595 = vmatpush1.msra.mxu0 0.0
    %596 = vmatprep.subr.mxu0 0.0
    %597 = vmatpush1.msra.mxu0 0.0
    %598 = vmatprep.subr.mxu0 0.0
    %599 = vmatpush1.msra.mxu0 0.0
    %600 = vmatprep.subr.mxu0 0.0
    %601 = vmatpush1.msra.mxu0 0.0
    %602 = vmatprep.subr.mxu0 0.0
    %603 = vmatpush1.msra.mxu0 0.0
    %604 = vmatprep.subr.mxu0 0.0
    %605 = vmatpush1.msra.mxu0 0.0
    %606 = vmatprep.subr.mxu0 0.0
    %607 = vmatpush1.msra.mxu0 0.0
    %608 = vmatprep.mubr.f32.mxu0 0.0
    %609 = vmatmul.mubr.f32.gmra.mrb[0].mxu0 %v350
    %v610 = vpop.f32.mrb[0].mxu0
    %v611 = vadd.f32 0.0, %v610
    %v612 = vpop.f32.mrb[0].mxu0
    %613 = vmatprep.mubr.f32.mxu0 0.0
    %614 = vmatmul.mubr.f32.gmra.mrb[0].mxu0 %v353
    %v615 = vpop.f32.mrb[0].mxu0
    %v616 = vadd.f32 0.0, %v615
    %v617 = vpop.f32.mrb[0].mxu0
    %618 = vmatprep.mubr.f32.mxu0 0.0
    %619 = vmatmul.mubr.f32.gmra.mrb[0].mxu0 %v356
    %v620 = vpop.f32.mrb[0].mxu0
    %v621 = vadd.f32 0.0, %v620
    %v622 = vpop.f32.mrb[0].mxu0
    %623 = vmatprep.mubr.f32.mxu0 0.0
    %624 = vmatmul.mubr.f32.gmra.mrb[0].mxu0 %v359
    %v625 = vpop.f32.mrb[0].mxu0
    %v626 = vadd.f32 0.0, %v625
    %v627 = vpop.f32.mrb[0].mxu0
    %628 = vmatprep.mubr.f32.mxu0 0.0
    %629 = vmatmul.mubr.f32.gmra.mrb[0].mxu0 %v362
    %v630 = vpop.f32.mrb[0].mxu0
    %v631 = vadd.f32 0.0, %v630
    %v632 = vpop.f32.mrb[0].mxu0
    %633 = vmatprep.mubr.f32.mxu0 0.0
    %634 = vmatmul.mubr.f32.gmra.mrb[0].mxu0 %v365
    %v635 = vpop.f32.mrb[0].mxu0
    %v636 = vadd.f32 0.0, %v635
    %v637 = vpop.f32.mrb[0].mxu0
    %638 = vmatprep.mubr.f32.mxu0 0.0
    %639 = vmatmul.mubr.f32.gmra.mrb[0].mxu0 %v368
    %v640 = vpop.f32.mrb[0].mxu0
    %v641 = vadd.f32 0.0, %v640
    %v642 = vpop.f32.mrb[0].mxu0
    %643 = vmatprep.mubr.f32.mxu0 0.0
    %644 = vmatmul.mubr.f32.gmra.mrb[0].mxu0 %v371
    %v645 = vpop.f32.mrb[0].mxu0
    %v646 = vadd.f32 0.0, %v645
    %v647 = vpop.f32.mrb[0].mxu0
    %648 = vmatprep.mubr.f32.mxu0 0.0
    %649 = vmatmul.mubr.f32.gmra.mrb[0].mxu0 %v374
    %v650 = vpop.f32.mrb[0].mxu0
    %v651 = vadd.f32 0.0, %v650
    %v652 = vpop.f32.mrb[0].mxu0
    %653 = vmatprep.mubr.f32.mxu0 0.0
    %654 = vmatmul.mubr.f32.gmra.mrb[0].mxu0 %v377
    %v655 = vpop.f32.mrb[0].mxu0
    %v656 = vadd.f32 0.0, %v655
    %v657 = vpop.f32.mrb[0].mxu0
    %658 = vmatprep.mubr.f32.mxu0 0.0
    %659 = vmatmul.mubr.f32.gmra.mrb[0].mxu0 %v380
    %v660 = vpop.f32.mrb[0].mxu0
    %v661 = vadd.f32 0.0, %v660
    %v662 = vpop.f32.mrb[0].mxu0
    %663 = vmatprep.mubr.f32.mxu0 0.0
    %664 = vmatmul.mubr.f32.gmra.mrb[0].mxu0 %v383
    %v665 = vpop.f32.mrb[0].mxu0
    %v666 = vadd.f32 0.0, %v665
    %v667 = vpop.f32.mrb[0].mxu0
    %668 = vmatprep.mubr.f32.mxu0 0.0
    %669 = vmatmul.mubr.f32.gmra.mrb[0].mxu0 %v386
    %v670 = vpop.f32.mrb[0].mxu0
    %v671 = vadd.f32 0.0, %v670
    %v672 = vpop.f32.mrb[0].mxu0
    %673 = vmatprep.mubr.f32.mxu0 0.0
    %674 = vmatmul.mubr.f32.gmra.mrb[0].mxu0 %v389
    %v675 = vpop.f32.mrb[0].mxu0
    %v676 = vadd.f32 0.0, %v675
    %v677 = vpop.f32.mrb[0].mxu0
    %678 = vmatprep.mubr.f32.mxu0 0.0
    %679 = vmatmul.mubr.f32.gmra.mrb[0].mxu0 %v392
    %v680 = vpop.f32.mrb[0].mxu0
    %v681 = vadd.f32 0.0, %v680
    %v682 = vpop.f32.mrb[0].mxu0
    %683 = vmatprep.mubr.f32.mxu0 0.0
    %684 = vmatmul.mubr.f32.gmra.mrb[0].mxu0 %v395
    %v685 = vpop.f32.mrb[0].mxu0
    %v686 = vadd.f32 0.0, %v685
    %v687 = vpop.f32.mrb[0].mxu0
    %688 = vmatprep.mubr.f32.mxu0 0.0
    %689 = vmatmul.mubr.f32.gmra.mrb[0].mxu0 %v398
    %v690 = vpop.f32.mrb[0].mxu0
    %v691 = vadd.f32 0.0, %v690
    %v692 = vpop.f32.mrb[0].mxu0
    %693 = vmatprep.mubr.f32.mxu0 0.0
    %694 = vmatmul.mubr.f32.gmra.mrb[0].mxu0 %v401
    %v695 = vpop.f32.mrb[0].mxu0
    %v696 = vadd.f32 0.0, %v695
    %v697 = vpop.f32.mrb[0].mxu0
    %698 = vmatprep.mubr.f32.mxu0 0.0
    %699 = vmatmul.mubr.f32.gmra.mrb[0].mxu0 %v404
    %v700 = vpop.f32.mrb[0].mxu0
    %v701 = vadd.f32 0.0, %v700
    %v702 = vpop.f32.mrb[0].mxu0
    %703 = vmatprep.mubr.f32.mxu0 0.0
    %704 = vmatmul.mubr.f32.gmra.mrb[0].mxu0 %v407
    %v705 = vpop.f32.mrb[0].mxu0
    %v706 = vadd.f32 0.0, %v705
    %v707 = vpop.f32.mrb[0].mxu0
    %708 = vmatprep.mubr.f32.mxu0 0.0
    %709 = vmatmul.mubr.f32.gmra.mrb[0].mxu0 %v410
    %v710 = vpop.f32.mrb[0].mxu0
    %v711 = vadd.f32 0.0, %v710
    %v712 = vpop.f32.mrb[0].mxu0
    %713 = vmatprep.mubr.f32.mxu0 0.0
    %714 = vmatmul.mubr.f32.gmra.mrb[0].mxu0 %v413
    %v715 = vpop.f32.mrb[0].mxu0
    %v716 = vadd.f32 0.0, %v715
    %v717 = vpop.f32.mrb[0].mxu0
    %718 = vmatprep.mubr.f32.mxu0 0.0
    %719 = vmatmul.mubr.f32.gmra.mrb[0].mxu0 %v416
    %v720 = vpop.f32.mrb[0].mxu0
    %v721 = vadd.f32 0.0, %v720
    %v722 = vpop.f32.mrb[0].mxu0
    %723 = vmatprep.mubr.f32.mxu0 0.0
    %724 = vmatmul.mubr.f32.gmra.mrb[0].mxu0 %v419
    %v725 = vpop.f32.mrb[0].mxu0
    %v726 = vadd.f32 0.0, %v725
    %v727 = vpop.f32.mrb[0].mxu0
    %728 = vmatprep.mubr.f32.mxu0 0.0
    %729 = vmatmul.mubr.f32.gmra.mrb[0].mxu0 %v422
    %v730 = vpop.f32.mrb[0].mxu0
    %v731 = vadd.f32 0.0, %v730
    %v732 = vpop.f32.mrb[0].mxu0
    %733 = vmatprep.mubr.f32.mxu0 0.0
    %734 = vmatmul.mubr.f32.gmra.mrb[0].mxu0 %v425
    %v735 = vpop.f32.mrb[0].mxu0
    %v736 = vadd.f32 0.0, %v735
    %v737 = vpop.f32.mrb[0].mxu0
    %738 = vmatprep.mubr.f32.mxu0 0.0
    %739 = vmatmul.mubr.f32.gmra.mrb[0].mxu0 %v428
    %v740 = vpop.f32.mrb[0].mxu0
    %v741 = vadd.f32 0.0, %v740
    %v742 = vpop.f32.mrb[0].mxu0
    %743 = vmatprep.mubr.f32.mxu0 0.0
    %744 = vmatmul.mubr.f32.gmra.mrb[0].mxu0 %v431
    %v745 = vpop.f32.mrb[0].mxu0
    %v746 = vadd.f32 0.0, %v745
    %v747 = vpop.f32.mrb[0].mxu0
    %748 = vmatprep.mubr.f32.mxu0 0.0
    %749 = vmatmul.mubr.f32.gmra.mrb[0].mxu0 %v434
    %v750 = vpop.f32.mrb[0].mxu0
    %v751 = vadd.f32 0.0, %v750
    %v752 = vpop.f32.mrb[0].mxu0
    %753 = vmatprep.mubr.f32.mxu0 0.0
    %754 = vmatmul.mubr.f32.gmra.mrb[0].mxu0 %v437
    %v755 = vpop.f32.mrb[0].mxu0
    %v756 = vadd.f32 0.0, %v755
    %v757 = vpop.f32.mrb[0].mxu0
    %758 = vmatprep.mubr.f32.mxu0 0.0
    %759 = vmatmul.mubr.f32.gmra.mrb[0].mxu0 %v440
    %v760 = vpop.f32.mrb[0].mxu0
    %v761 = vadd.f32 0.0, %v760
    %v762 = vpop.f32.mrb[0].mxu0
    %763 = vmatprep.mubr.f32.mxu0 0.0
    %764 = vmatmul.mubr.f32.gmra.mrb[0].mxu0 %v443
    %v765 = vpop.f32.mrb[0].mxu0
    %v766 = vadd.f32 0.0, %v765
    %v767 = vpop.f32.mrb[0].mxu0
    %768 = vmatprep.mubr.f32.mxu0 0.0
    %769 = vmatmul.mubr.f32.gmra.mrb[0].mxu0 %v446
    %v770 = vpop.f32.mrb[0].mxu0
    %v771 = vadd.f32 0.0, %v770
    %v772 = vpop.f32.mrb[0].mxu0
    %773 = vmatprep.mubr.f32.mxu0 0.0
    %774 = vmatmul.mubr.f32.gmra.mrb[0].mxu0 %v449
    %v775 = vpop.f32.mrb[0].mxu0
    %v776 = vadd.f32 0.0, %v775
    %v777 = vpop.f32.mrb[0].mxu0
    %778 = vmatprep.mubr.f32.mxu0 0.0
    %779 = vmatmul.mubr.f32.gmra.mrb[0].mxu0 %v452
    %v780 = vpop.f32.mrb[0].mxu0
    %v781 = vadd.f32 0.0, %v780
    %v782 = vpop.f32.mrb[0].mxu0
    %783 = vmatprep.mubr.f32.mxu0 0.0
    %784 = vmatmul.mubr.f32.gmra.mrb[0].mxu0 %v455
    %v785 = vpop.f32.mrb[0].mxu0
    %v786 = vadd.f32 0.0, %v785
    %v787 = vpop.f32.mrb[0].mxu0
    %788 = vmatprep.mubr.f32.mxu0 0.0
    %789 = vmatmul.mubr.f32.gmra.mrb[0].mxu0 %v458
    %v790 = vpop.f32.mrb[0].mxu0
    %v791 = vadd.f32 0.0, %v790
    %v792 = vpop.f32.mrb[0].mxu0
    %793 = vmatprep.mubr.f32.mxu0 0.0
    %794 = vmatmul.mubr.f32.gmra.mrb[0].mxu0 %v461
    %v795 = vpop.f32.mrb[0].mxu0
    %v796 = vadd.f32 0.0, %v795
    %v797 = vpop.f32.mrb[0].mxu0
    %798 = vmatprep.mubr.f32.mxu0 0.0
    %799 = vmatmul.mubr.f32.gmra.mrb[0].mxu0 %v464
    %v800 = vpop.f32.mrb[0].mxu0
    %v801 = vadd.f32 0.0, %v800
    %v802 = vpop.f32.mrb[0].mxu0
    %803 = vmatprep.mubr.f32.mxu0 0.0
    %804 = vmatmul.mubr.f32.gmra.mrb[0].mxu0 %v467
    %v805 = vpop.f32.mrb[0].mxu0
    %v806 = vadd.f32 0.0, %v805
    %v807 = vpop.f32.mrb[0].mxu0
    %808 = vmatprep.mubr.f32.mxu0 0.0
    %809 = vmatmul.mubr.f32.gmra.mrb[0].mxu0 %v470
    %v810 = vpop.f32.mrb[0].mxu0
    %v811 = vadd.f32 0.0, %v810
    %v812 = vpop.f32.mrb[0].mxu0
    %813 = vmatprep.mubr.f32.mxu0 0.0
    %814 = vmatmul.mubr.f32.gmra.mrb[0].mxu0 %v473
    %v815 = vpop.f32.mrb[0].mxu0
    %v816 = vadd.f32 0.0, %v815
    %v817 = vpop.f32.mrb[0].mxu0
    %818 = vmatprep.mubr.f32.mxu0 0.0
    %819 = vmatmul.mubr.f32.gmra.mrb[0].mxu0 %v476
    %v820 = vpop.f32.mrb[0].mxu0
    %v821 = vadd.f32 0.0, %v820
    %v822 = vpop.f32.mrb[0].mxu0
    %823 = vmatprep.mubr.f32.mxu0 0.0
    %824 = vmatmul.mubr.f32.gmra.mrb[0].mxu0 %v479
    %v825 = vpop.f32.mrb[0].mxu0
    %v826 = vadd.f32 0.0, %v825
    %v827 = vpop.f32.mrb[0].mxu0
    %828 = vmatprep.mubr.f32.mxu0 0.0
    %829 = vmatmul.mubr.f32.gmra.mrb[0].mxu0 %v482
    %v830 = vpop.f32.mrb[0].mxu0
    %v831 = vadd.f32 0.0, %v830
    %v832 = vpop.f32.mrb[0].mxu0
    %833 = vmatprep.mubr.f32.mxu0 0.0
    %834 = vmatmul.mubr.f32.gmra.mrb[0].mxu0 %v485
    %v835 = vpop.f32.mrb[0].mxu0
    %v836 = vadd.f32 0.0, %v835
    %v837 = vpop.f32.mrb[0].mxu0
    %838 = vmatprep.mubr.f32.mxu0 0.0
    %839 = vmatmul.mubr.f32.gmra.mrb[0].mxu0 %v488
    %v840 = vpop.f32.mrb[0].mxu0
    %v841 = vadd.f32 0.0, %v840
    %v842 = vpop.f32.mrb[0].mxu0
    %843 = vmatprep.mubr.f32.mxu0 0.0
    %844 = vmatmul.mubr.f32.gmra.mrb[0].mxu0 %v491
    %v845 = vpop.f32.mrb[0].mxu0
    %v846 = vadd.f32 0.0, %v845
    %v847 = vpop.f32.mrb[0].mxu0
    %848 = vmatprep.mubr.f32.mxu0 0.0
    %849 = vmatmul.mubr.f32.gmra.mrb[0].mxu0 %v494
    %v850 = vpop.f32.mrb[0].mxu0
    %v851 = vadd.f32 0.0, %v850
    %v852 = vpop.f32.mrb[0].mxu0
    %853 = vmatprep.mubr.f32.mxu0 0.0
    %854 = vmatmul.mubr.f32.gmra.mrb[0].mxu0 %v497
    %v855 = vpop.f32.mrb[0].mxu0
    %v856 = vadd.f32 0.0, %v855
    %v857 = vpop.f32.mrb[0].mxu0
    %858 = vmatprep.mubr.f32.mxu0 0.0
    %859 = vmatmul.mubr.f32.gmra.mrb[0].mxu0 %v500
    %v860 = vpop.f32.mrb[0].mxu0
    %v861 = vadd.f32 0.0, %v860
    %v862 = vpop.f32.mrb[0].mxu0
    %863 = vmatprep.mubr.f32.mxu0 0.0
    %864 = vmatmul.mubr.f32.gmra.mrb[0].mxu0 %v503
    %v865 = vpop.f32.mrb[0].mxu0
    %v866 = vadd.f32 0.0, %v865
    %v867 = vpop.f32.mrb[0].mxu0
    %868 = vmatprep.mubr.f32.mxu0 0.0
    %869 = vmatmul.mubr.f32.gmra.mrb[0].mxu0 %v506
    %v870 = vpop.f32.mrb[0].mxu0
    %v871 = vadd.f32 0.0, %v870
    %v872 = vpop.f32.mrb[0].mxu0
    %873 = vmatprep.mubr.f32.mxu0 0.0
    %874 = vmatmul.mubr.f32.gmra.mrb[0].mxu0 %v509
    %v875 = vpop.f32.mrb[0].mxu0
    %v876 = vadd.f32 0.0, %v875
    %v877 = vpop.f32.mrb[0].mxu0
    %878 = vmatprep.mubr.f32.mxu0 0.0
    %879 = vmatmul.mubr.f32.gmra.mrb[0].mxu0 %v512
    %v880 = vpop.f32.mrb[0].mxu0
    %v881 = vadd.f32 0.0, %v880
    %v882 = vpop.f32.mrb[0].mxu0
    %883 = vmatprep.mubr.f32.mxu0 0.0
    %884 = vmatmul.mubr.f32.gmra.mrb[0].mxu0 %v515
    %v885 = vpop.f32.mrb[0].mxu0
    %v886 = vadd.f32 0.0, %v885
    %v887 = vpop.f32.mrb[0].mxu0
    %888 = vmatprep.mubr.f32.mxu0 0.0
    %889 = vmatmul.mubr.f32.gmra.mrb[0].mxu0 %v518
    %v890 = vpop.f32.mrb[0].mxu0
    %v891 = vadd.f32 0.0, %v890
    %v892 = vpop.f32.mrb[0].mxu0
    %893 = vmatprep.mubr.f32.mxu0 0.0
    %894 = vmatmul.mubr.f32.gmra.mrb[0].mxu0 %v521
    %v895 = vpop.f32.mrb[0].mxu0
    %v896 = vadd.f32 0.0, %v895
    %v897 = vpop.f32.mrb[0].mxu0
    %898 = vmatprep.mubr.f32.mxu0 0.0
    %899 = vmatmul.mubr.f32.gmra.mrb[0].mxu0 %v524
    %v900 = vpop.f32.mrb[0].mxu0
    %v901 = vadd.f32 0.0, %v900
    %v902 = vpop.f32.mrb[0].mxu0
    %903 = vmatprep.mubr.f32.mxu0 0.0
    %904 = vmatmul.mubr.f32.gmra.mrb[0].mxu0 %v527
    %v905 = vpop.f32.mrb[0].mxu0
    %v906 = vadd.f32 0.0, %v905
    %v907 = vpop.f32.mrb[0].mxu0
    %908 = vmatprep.mubr.f32.mxu0 0.0
    %909 = vmatmul.mubr.f32.gmra.mrb[0].mxu0 %v530
    %v910 = vpop.f32.mrb[0].mxu0
    %v911 = vadd.f32 0.0, %v910
    %v912 = vpop.f32.mrb[0].mxu0
    %913 = vmatprep.mubr.f32.mxu0 0.0
    %914 = vmatmul.mubr.f32.gmra.mrb[0].mxu0 %v533
    %v915 = vpop.f32.mrb[0].mxu0
    %v916 = vadd.f32 0.0, %v915
    %v917 = vpop.f32.mrb[0].mxu0
    %918 = vmatprep.mubr.f32.mxu0 0.0
    %919 = vmatmul.mubr.f32.gmra.mrb[0].mxu0 %v536
    %v920 = vpop.f32.mrb[0].mxu0
    %v921 = vadd.f32 0.0, %v920
    %v922 = vpop.f32.mrb[0].mxu0
    %923 = vmatprep.mubr.f32.mxu0 0.0
    %924 = vmatmul.mubr.f32.gmra.mrb[0].mxu0 %v539
    %v925 = vpop.f32.mrb[0].mxu0
    %v926 = vadd.f32 0.0, %v925
    %v927 = vpop.f32.mrb[0].mxu0
    %928 = vdwg.mxu0
    %v929 = vadd.f32 %v150, %v348
    %v930 = vadd.f32 %v153, %v348
    %v931 = vadd.f32 %v156, %v348
    %v932 = vadd.f32 %v159, %v348
    %v933 = vadd.f32 %v162, %v348
    %v934 = vadd.f32 %v165, %v348
    %v935 = vadd.f32 %v168, %v348
    %v936 = vadd.f32 %v171, %v348
    %v937 = vadd.f32 %v174, %v348
    %v938 = vadd.f32 %v177, %v348
    %v939 = vadd.f32 %v180, %v348
    %v940 = vadd.f32 %v183, %v348
    %v941 = vadd.f32 %v186, %v348
    %v942 = vadd.f32 %v189, %v348
    %v943 = vadd.f32 %v192, %v348
    %v944 = vadd.f32 %v195, %v348
    %v945 = vadd.f32 %v198, %v348
    %v946 = vadd.f32 %v201, %v348
    %v947 = vadd.f32 %v204, %v348
    %v948 = vadd.f32 %v207, %v348
    %v949 = vadd.f32 %v210, %v348
    %v950 = vadd.f32 %v213, %v348
    %v951 = vadd.f32 %v216, %v348
    %v952 = vadd.f32 %v219, %v348
    %v953 = vadd.f32 %v222, %v348
    %v954 = vadd.f32 %v225, %v348
    %v955 = vadd.f32 %v228, %v348
    %v956 = vadd.f32 %v231, %v348
    %v957 = vadd.f32 %v234, %v348
    %v958 = vadd.f32 %v237, %v348
    %v959 = vadd.f32 %v240, %v348
    %v960 = vadd.f32 %v243, %v348
    %v961 = vadd.f32 %v246, %v348
    %v962 = vadd.f32 %v249, %v348
    %v963 = vadd.f32 %v252, %v348
    %v964 = vadd.f32 %v255, %v348
    %v965 = vadd.f32 %v258, %v348
    %v966 = vadd.f32 %v261, %v348
    %v967 = vadd.f32 %v264, %v348
    %v968 = vadd.f32 %v267, %v348
    %v969 = vadd.f32 %v270, %v348
    %v970 = vadd.f32 %v273, %v348
    %v971 = vadd.f32 %v276, %v348
    %v972 = vadd.f32 %v279, %v348
    %v973 = vadd.f32 %v282, %v348
    %v974 = vadd.f32 %v285, %v348
    %v975 = vadd.f32 %v288, %v348
    %v976 = vadd.f32 %v291, %v348
    %v977 = vadd.f32 %v294, %v348
    %v978 = vadd.f32 %v297, %v348
    %v979 = vadd.f32 %v300, %v348
    %v980 = vadd.f32 %v303, %v348
    %v981 = vadd.f32 %v306, %v348
    %v982 = vadd.f32 %v309, %v348
    %v983 = vadd.f32 %v312, %v348
    %v984 = vadd.f32 %v315, %v348
    %v985 = vadd.f32 %v318, %v348
    %v986 = vadd.f32 %v321, %v348
    %v987 = vadd.f32 %v324, %v348
    %v988 = vadd.f32 %v327, %v348
    %v989 = vadd.f32 %v330, %v348
    %v990 = vadd.f32 %v333, %v348
    %v991 = vadd.f32 %v336, %v348
    %v992 = vadd.f32 %v339, %v348
    %v993 = vmul.f32 %v611, 2.0
    %v994 = vmul.f32 %v616, 2.0
    %v995 = vmul.f32 %v621, 2.0
    %v996 = vmul.f32 %v626, 2.0
    %v997 = vmul.f32 %v631, 2.0
    %v998 = vmul.f32 %v636, 2.0
    %v999 = vmul.f32 %v641, 2.0
    %v1000 = vmul.f32 %v646, 2.0
    %v1001 = vmul.f32 %v651, 2.0
    %v1002 = vmul.f32 %v656, 2.0
    %v1003 = vmul.f32 %v661, 2.0
    %v1004 = vmul.f32 %v666, 2.0
    %v1005 = vmul.f32 %v671, 2.0
    %v1006 = vmul.f32 %v676, 2.0
    %v1007 = vmul.f32 %v681, 2.0
    %v1008 = vmul.f32 %v686, 2.0
    %v1009 = vmul.f32 %v691, 2.0
    %v1010 = vmul.f32 %v696, 2.0
    %v1011 = vmul.f32 %v701, 2.0
    %v1012 = vmul.f32 %v706, 2.0
    %v1013 = vmul.f32 %v711, 2.0
    %v1014 = vmul.f32 %v716, 2.0
    %v1015 = vmul.f32 %v721, 2.0
    %v1016 = vmul.f32 %v726, 2.0
    %v1017 = vmul.f32 %v731, 2.0
    %v1018 = vmul.f32 %v736, 2.0
    %v1019 = vmul.f32 %v741, 2.0
    %v1020 = vmul.f32 %v746, 2.0
    %v1021 = vmul.f32 %v751, 2.0
    %v1022 = vmul.f32 %v756, 2.0
    %v1023 = vmul.f32 %v761, 2.0
    %v1024 = vmul.f32 %v766, 2.0
    %v1025 = vmul.f32 %v771, 2.0
    %v1026 = vmul.f32 %v776, 2.0
    %v1027 = vmul.f32 %v781, 2.0
    %v1028 = vmul.f32 %v786, 2.0
    %v1029 = vmul.f32 %v791, 2.0
    %v1030 = vmul.f32 %v796, 2.0
    %v1031 = vmul.f32 %v801, 2.0
    %v1032 = vmul.f32 %v806, 2.0
    %v1033 = vmul.f32 %v811, 2.0
    %v1034 = vmul.f32 %v816, 2.0
    %v1035 = vmul.f32 %v821, 2.0
    %v1036 = vmul.f32 %v826, 2.0
    %v1037 = vmul.f32 %v831, 2.0
    %v1038 = vmul.f32 %v836, 2.0
    %v1039 = vmul.f32 %v841, 2.0
    %v1040 = vmul.f32 %v846, 2.0
    %v1041 = vmul.f32 %v851, 2.0
    %v1042 = vmul.f32 %v856, 2.0
    %v1043 = vmul.f32 %v861, 2.0
    %v1044 = vmul.f32 %v866, 2.0
    %v1045 = vmul.f32 %v871, 2.0
    %v1046 = vmul.f32 %v876, 2.0
    %v1047 = vmul.f32 %v881, 2.0
    %v1048 = vmul.f32 %v886, 2.0
    %v1049 = vmul.f32 %v891, 2.0
    %v1050 = vmul.f32 %v896, 2.0
    %v1051 = vmul.f32 %v901, 2.0
    %v1052 = vmul.f32 %v906, 2.0
    %v1053 = vmul.f32 %v911, 2.0
    %v1054 = vmul.f32 %v916, 2.0
    %v1055 = vmul.f32 %v921, 2.0
    %v1056 = vmul.f32 %v926, 2.0
    %v1057 = vsub.f32 %v929, %v993
    %v1058 = vsub.f32 %v930, %v994
    %v1059 = vsub.f32 %v931, %v995
    %v1060 = vsub.f32 %v932, %v996
    %v1061 = vsub.f32 %v933, %v997
    %v1062 = vsub.f32 %v934, %v998
    %v1063 = vsub.f32 %v935, %v999
    %v1064 = vsub.f32 %v936, %v1000
    %v1065 = vsub.f32 %v937, %v1001
    %v1066 = vsub.f32 %v938, %v1002
    %v1067 = vsub.f32 %v939, %v1003
    %v1068 = vsub.f32 %v940, %v1004
    %v1069 = vsub.f32 %v941, %v1005
    %v1070 = vsub.f32 %v942, %v1006
    %v1071 = vsub.f32 %v943, %v1007
    %v1072 = vsub.f32 %v944, %v1008
    %v1073 = vsub.f32 %v945, %v1009
    %v1074 = vsub.f32 %v946, %v1010
    %v1075 = vsub.f32 %v947, %v1011
    %v1076 = vsub.f32 %v948, %v1012
    %v1077 = vsub.f32 %v949, %v1013
    %v1078 = vsub.f32 %v950, %v1014
    %v1079 = vsub.f32 %v951, %v1015
    %v1080 = vsub.f32 %v952, %v1016
    %v1081 = vsub.f32 %v953, %v1017
    %v1082 = vsub.f32 %v954, %v1018
    %v1083 = vsub.f32 %v955, %v1019
    %v1084 = vsub.f32 %v956, %v1020
    %v1085 = vsub.f32 %v957, %v1021
    %v1086 = vsub.f32 %v958, %v1022
    %v1087 = vsub.f32 %v959, %v1023
    %v1088 = vsub.f32 %v960, %v1024
    %v1089 = vsub.f32 %v961, %v1025
    %v1090 = vsub.f32 %v962, %v1026
    %v1091 = vsub.f32 %v963, %v1027
    %v1092 = vsub.f32 %v964, %v1028
    %v1093 = vsub.f32 %v965, %v1029
    %v1094 = vsub.f32 %v966, %v1030
    %v1095 = vsub.f32 %v967, %v1031
    %v1096 = vsub.f32 %v968, %v1032
    %v1097 = vsub.f32 %v969, %v1033
    %v1098 = vsub.f32 %v970, %v1034
    %v1099 = vsub.f32 %v971, %v1035
    %v1100 = vsub.f32 %v972, %v1036
    %v1101 = vsub.f32 %v973, %v1037
    %v1102 = vsub.f32 %v974, %v1038
    %v1103 = vsub.f32 %v975, %v1039
    %v1104 = vsub.f32 %v976, %v1040
    %v1105 = vsub.f32 %v977, %v1041
    %v1106 = vsub.f32 %v978, %v1042
    %v1107 = vsub.f32 %v979, %v1043
    %v1108 = vsub.f32 %v980, %v1044
    %v1109 = vsub.f32 %v981, %v1045
    %v1110 = vsub.f32 %v982, %v1046
    %v1111 = vsub.f32 %v983, %v1047
    %v1112 = vsub.f32 %v984, %v1048
    %v1113 = vsub.f32 %v985, %v1049
    %v1114 = vsub.f32 %v986, %v1050
    %v1115 = vsub.f32 %v987, %v1051
    %v1116 = vsub.f32 %v988, %v1052
    %v1117 = vsub.f32 %v989, %v1053
    %v1118 = vsub.f32 %v990, %v1054
    %v1119 = vsub.f32 %v991, %v1055
    %v1120 = vsub.f32 %v992, %v1056
    %v1121 = vlaneseq
    %v1122 = vand.u32 %v1121, 127
    %1123 = vmin.xlane.f32.xlu0 %v1057
    %v1124 = vpop.xlane.xlu0 %1123
    %1125 = vmin.xlane.f32.xlu0 %v1058
    %v1126 = vpop.xlane.xlu0 %1125
    %1127 = vmin.xlane.f32.xlu0 %v1059
    %v1128 = vpop.xlane.xlu0 %1127
    %1129 = vmin.xlane.f32.xlu0 %v1060
    %v1130 = vpop.xlane.xlu0 %1129
    %1131 = vmin.xlane.f32.xlu0 %v1061
    %v1132 = vpop.xlane.xlu0 %1131
    %1133 = vmin.xlane.f32.xlu0 %v1062
    %v1134 = vpop.xlane.xlu0 %1133
    %1135 = vmin.xlane.f32.xlu0 %v1063
    %v1136 = vpop.xlane.xlu0 %1135
    %1137 = vmin.xlane.f32.xlu0 %v1064
    %v1138 = vpop.xlane.xlu0 %1137
    %1139 = vmin.xlane.f32.xlu0 %v1065
    %v1140 = vpop.xlane.xlu0 %1139
    %1141 = vmin.xlane.f32.xlu0 %v1066
    %v1142 = vpop.xlane.xlu0 %1141
    %1143 = vmin.xlane.f32.xlu0 %v1067
    %v1144 = vpop.xlane.xlu0 %1143
    %1145 = vmin.xlane.f32.xlu0 %v1068
    %v1146 = vpop.xlane.xlu0 %1145
    %1147 = vmin.xlane.f32.xlu0 %v1069
    %v1148 = vpop.xlane.xlu0 %1147
    %1149 = vmin.xlane.f32.xlu0 %v1070
    %v1150 = vpop.xlane.xlu0 %1149
    %1151 = vmin.xlane.f32.xlu0 %v1071
    %v1152 = vpop.xlane.xlu0 %1151
    %1153 = vmin.xlane.f32.xlu0 %v1072
    %v1154 = vpop.xlane.xlu0 %1153
    %1155 = vmin.xlane.f32.xlu0 %v1073
    %v1156 = vpop.xlane.xlu0 %1155
    %1157 = vmin.xlane.f32.xlu0 %v1074
    %v1158 = vpop.xlane.xlu0 %1157
    %1159 = vmin.xlane.f32.xlu0 %v1075
    %v1160 = vpop.xlane.xlu0 %1159
    %1161 = vmin.xlane.f32.xlu0 %v1076
    %v1162 = vpop.xlane.xlu0 %1161
    %1163 = vmin.xlane.f32.xlu0 %v1077
    %v1164 = vpop.xlane.xlu0 %1163
    %1165 = vmin.xlane.f32.xlu0 %v1078
    %v1166 = vpop.xlane.xlu0 %1165
    %1167 = vmin.xlane.f32.xlu0 %v1079
    %v1168 = vpop.xlane.xlu0 %1167
    %1169 = vmin.xlane.f32.xlu0 %v1080
    %v1170 = vpop.xlane.xlu0 %1169
    %1171 = vmin.xlane.f32.xlu0 %v1081
    %v1172 = vpop.xlane.xlu0 %1171
    %1173 = vmin.xlane.f32.xlu0 %v1082
    %v1174 = vpop.xlane.xlu0 %1173
    %1175 = vmin.xlane.f32.xlu0 %v1083
    %v1176 = vpop.xlane.xlu0 %1175
    %1177 = vmin.xlane.f32.xlu0 %v1084
    %v1178 = vpop.xlane.xlu0 %1177
    %1179 = vmin.xlane.f32.xlu0 %v1085
    %v1180 = vpop.xlane.xlu0 %1179
    %1181 = vmin.xlane.f32.xlu0 %v1086
    %v1182 = vpop.xlane.xlu0 %1181
    %1183 = vmin.xlane.f32.xlu0 %v1087
    %v1184 = vpop.xlane.xlu0 %1183
    %1185 = vmin.xlane.f32.xlu0 %v1088
    %v1186 = vpop.xlane.xlu0 %1185
    %1187 = vmin.xlane.f32.xlu0 %v1089
    %v1188 = vpop.xlane.xlu0 %1187
    %1189 = vmin.xlane.f32.xlu0 %v1090
    %v1190 = vpop.xlane.xlu0 %1189
    %1191 = vmin.xlane.f32.xlu0 %v1091
    %v1192 = vpop.xlane.xlu0 %1191
    %1193 = vmin.xlane.f32.xlu0 %v1092
    %v1194 = vpop.xlane.xlu0 %1193
    %1195 = vmin.xlane.f32.xlu0 %v1093
    %v1196 = vpop.xlane.xlu0 %1195
    %1197 = vmin.xlane.f32.xlu0 %v1094
    %v1198 = vpop.xlane.xlu0 %1197
    %1199 = vmin.xlane.f32.xlu0 %v1095
    %v1200 = vpop.xlane.xlu0 %1199
    %1201 = vmin.xlane.f32.xlu0 %v1096
    %v1202 = vpop.xlane.xlu0 %1201
    %1203 = vmin.xlane.f32.xlu0 %v1097
    %v1204 = vpop.xlane.xlu0 %1203
    %1205 = vmin.xlane.f32.xlu0 %v1098
    %v1206 = vpop.xlane.xlu0 %1205
    %1207 = vmin.xlane.f32.xlu0 %v1099
    %v1208 = vpop.xlane.xlu0 %1207
    %1209 = vmin.xlane.f32.xlu0 %v1100
    %v1210 = vpop.xlane.xlu0 %1209
    %1211 = vmin.xlane.f32.xlu0 %v1101
    %v1212 = vpop.xlane.xlu0 %1211
    %1213 = vmin.xlane.f32.xlu0 %v1102
    %v1214 = vpop.xlane.xlu0 %1213
    %1215 = vmin.xlane.f32.xlu0 %v1103
    %v1216 = vpop.xlane.xlu0 %1215
    %1217 = vmin.xlane.f32.xlu0 %v1104
    %v1218 = vpop.xlane.xlu0 %1217
    %1219 = vmin.xlane.f32.xlu0 %v1105
    %v1220 = vpop.xlane.xlu0 %1219
    %1221 = vmin.xlane.f32.xlu0 %v1106
    %v1222 = vpop.xlane.xlu0 %1221
    %1223 = vmin.xlane.f32.xlu0 %v1107
    %v1224 = vpop.xlane.xlu0 %1223
    %1225 = vmin.xlane.f32.xlu0 %v1108
    %v1226 = vpop.xlane.xlu0 %1225
    %1227 = vmin.xlane.f32.xlu0 %v1109
    %v1228 = vpop.xlane.xlu0 %1227
    %1229 = vmin.xlane.f32.xlu0 %v1110
    %v1230 = vpop.xlane.xlu0 %1229
    %1231 = vmin.xlane.f32.xlu0 %v1111
    %v1232 = vpop.xlane.xlu0 %1231
    %1233 = vmin.xlane.f32.xlu0 %v1112
    %v1234 = vpop.xlane.xlu0 %1233
    %1235 = vmin.xlane.f32.xlu0 %v1113
    %v1236 = vpop.xlane.xlu0 %1235
    %1237 = vmin.xlane.f32.xlu0 %v1114
    %v1238 = vpop.xlane.xlu0 %1237
    %1239 = vmin.xlane.f32.xlu0 %v1115
    %v1240 = vpop.xlane.xlu0 %1239
    %1241 = vmin.xlane.f32.xlu0 %v1116
    %v1242 = vpop.xlane.xlu0 %1241
    %1243 = vmin.xlane.f32.xlu0 %v1117
    %v1244 = vpop.xlane.xlu0 %1243
    %1245 = vmin.xlane.f32.xlu0 %v1118
    %v1246 = vpop.xlane.xlu0 %1245
    %1247 = vmin.xlane.f32.xlu0 %v1119
    %v1248 = vpop.xlane.xlu0 %1247
    %1249 = vmin.xlane.f32.xlu0 %v1120
    %v1250 = vpop.xlane.xlu0 %1249
    %vm1251 = vcmp.le.f32.partialorder %v1057, %v1124
    %vm1252 = vcmp.le.f32.partialorder %v1058, %v1126
    %vm1253 = vcmp.le.f32.partialorder %v1059, %v1128
    %vm1254 = vcmp.le.f32.partialorder %v1060, %v1130
    %vm1255 = vcmp.le.f32.partialorder %v1061, %v1132
    %vm1256 = vcmp.le.f32.partialorder %v1062, %v1134
    %vm1257 = vcmp.le.f32.partialorder %v1063, %v1136
    %vm1258 = vcmp.le.f32.partialorder %v1064, %v1138
    %vm1259 = vcmp.le.f32.partialorder %v1065, %v1140
    %vm1260 = vcmp.le.f32.partialorder %v1066, %v1142
    %vm1261 = vcmp.le.f32.partialorder %v1067, %v1144
    %vm1262 = vcmp.le.f32.partialorder %v1068, %v1146
    %vm1263 = vcmp.le.f32.partialorder %v1069, %v1148
    %vm1264 = vcmp.le.f32.partialorder %v1070, %v1150
    %vm1265 = vcmp.le.f32.partialorder %v1071, %v1152
    %vm1266 = vcmp.le.f32.partialorder %v1072, %v1154
    %vm1267 = vcmp.le.f32.partialorder %v1073, %v1156
    %vm1268 = vcmp.le.f32.partialorder %v1074, %v1158
    %vm1269 = vcmp.le.f32.partialorder %v1075, %v1160
    %vm1270 = vcmp.le.f32.partialorder %v1076, %v1162
    %vm1271 = vcmp.le.f32.partialorder %v1077, %v1164
    %vm1272 = vcmp.le.f32.partialorder %v1078, %v1166
    %vm1273 = vcmp.le.f32.partialorder %v1079, %v1168
    %vm1274 = vcmp.le.f32.partialorder %v1080, %v1170
    %vm1275 = vcmp.le.f32.partialorder %v1081, %v1172
    %vm1276 = vcmp.le.f32.partialorder %v1082, %v1174
    %vm1277 = vcmp.le.f32.partialorder %v1083, %v1176
    %vm1278 = vcmp.le.f32.partialorder %v1084, %v1178
    %vm1279 = vcmp.le.f32.partialorder %v1085, %v1180
    %vm1280 = vcmp.le.f32.partialorder %v1086, %v1182
    %vm1281 = vcmp.le.f32.partialorder %v1087, %v1184
    %vm1282 = vcmp.le.f32.partialorder %v1088, %v1186
    %vm1283 = vcmp.le.f32.partialorder %v1089, %v1188
    %vm1284 = vcmp.le.f32.partialorder %v1090, %v1190
    %vm1285 = vcmp.le.f32.partialorder %v1091, %v1192
    %vm1286 = vcmp.le.f32.partialorder %v1092, %v1194
    %vm1287 = vcmp.le.f32.partialorder %v1093, %v1196
    %vm1288 = vcmp.le.f32.partialorder %v1094, %v1198
    %vm1289 = vcmp.le.f32.partialorder %v1095, %v1200
    %vm1290 = vcmp.le.f32.partialorder %v1096, %v1202
    %vm1291 = vcmp.le.f32.partialorder %v1097, %v1204
    %vm1292 = vcmp.le.f32.partialorder %v1098, %v1206
    %vm1293 = vcmp.le.f32.partialorder %v1099, %v1208
    %vm1294 = vcmp.le.f32.partialorder %v1100, %v1210
    %vm1295 = vcmp.le.f32.partialorder %v1101, %v1212
    %vm1296 = vcmp.le.f32.partialorder %v1102, %v1214
    %vm1297 = vcmp.le.f32.partialorder %v1103, %v1216
    %vm1298 = vcmp.le.f32.partialorder %v1104, %v1218
    %vm1299 = vcmp.le.f32.partialorder %v1105, %v1220
    %vm1300 = vcmp.le.f32.partialorder %v1106, %v1222
    %vm1301 = vcmp.le.f32.partialorder %v1107, %v1224
    %vm1302 = vcmp.le.f32.partialorder %v1108, %v1226
    %vm1303 = vcmp.le.f32.partialorder %v1109, %v1228
    %vm1304 = vcmp.le.f32.partialorder %v1110, %v1230
    %vm1305 = vcmp.le.f32.partialorder %v1111, %v1232
    %vm1306 = vcmp.le.f32.partialorder %v1112, %v1234
    %vm1307 = vcmp.le.f32.partialorder %v1113, %v1236
    %vm1308 = vcmp.le.f32.partialorder %v1114, %v1238
    %vm1309 = vcmp.le.f32.partialorder %v1115, %v1240
    %vm1310 = vcmp.le.f32.partialorder %v1116, %v1242
    %vm1311 = vcmp.le.f32.partialorder %v1117, %v1244
    %vm1312 = vcmp.le.f32.partialorder %v1118, %v1246
    %vm1313 = vcmp.le.f32.partialorder %v1119, %v1248
    %vm1314 = vcmp.le.f32.partialorder %v1120, %v1250
    %v1315 = vsel %vm1251, %v1122, 128
    %v1316 = vsel %vm1252, %v1122, 128
    %v1317 = vsel %vm1253, %v1122, 128
    %v1318 = vsel %vm1254, %v1122, 128
    %v1319 = vsel %vm1255, %v1122, 128
    %v1320 = vsel %vm1256, %v1122, 128
    %v1321 = vsel %vm1257, %v1122, 128
    %v1322 = vsel %vm1258, %v1122, 128
    %v1323 = vsel %vm1259, %v1122, 128
    %v1324 = vsel %vm1260, %v1122, 128
    %v1325 = vsel %vm1261, %v1122, 128
    %v1326 = vsel %vm1262, %v1122, 128
    %v1327 = vsel %vm1263, %v1122, 128
    %v1328 = vsel %vm1264, %v1122, 128
    %v1329 = vsel %vm1265, %v1122, 128
    %v1330 = vsel %vm1266, %v1122, 128
    %v1331 = vsel %vm1267, %v1122, 128
    %v1332 = vsel %vm1268, %v1122, 128
    %v1333 = vsel %vm1269, %v1122, 128
    %v1334 = vsel %vm1270, %v1122, 128
    %v1335 = vsel %vm1271, %v1122, 128
    %v1336 = vsel %vm1272, %v1122, 128
    %v1337 = vsel %vm1273, %v1122, 128
    %v1338 = vsel %vm1274, %v1122, 128
    %v1339 = vsel %vm1275, %v1122, 128
    %v1340 = vsel %vm1276, %v1122, 128
    %v1341 = vsel %vm1277, %v1122, 128
    %v1342 = vsel %vm1278, %v1122, 128
    %v1343 = vsel %vm1279, %v1122, 128
    %v1344 = vsel %vm1280, %v1122, 128
    %v1345 = vsel %vm1281, %v1122, 128
    %v1346 = vsel %vm1282, %v1122, 128
    %v1347 = vsel %vm1283, %v1122, 128
    %v1348 = vsel %vm1284, %v1122, 128
    %v1349 = vsel %vm1285, %v1122, 128
    %v1350 = vsel %vm1286, %v1122, 128
    %v1351 = vsel %vm1287, %v1122, 128
    %v1352 = vsel %vm1288, %v1122, 128
    %v1353 = vsel %vm1289, %v1122, 128
    %v1354 = vsel %vm1290, %v1122, 128
    %v1355 = vsel %vm1291, %v1122, 128
    %v1356 = vsel %vm1292, %v1122, 128
    %v1357 = vsel %vm1293, %v1122, 128
    %v1358 = vsel %vm1294, %v1122, 128
    %v1359 = vsel %vm1295, %v1122, 128
    %v1360 = vsel %vm1296, %v1122, 128
    %v1361 = vsel %vm1297, %v1122, 128
    %v1362 = vsel %vm1298, %v1122, 128
    %v1363 = vsel %vm1299, %v1122, 128
    %v1364 = vsel %vm1300, %v1122, 128
    %v1365 = vsel %vm1301, %v1122, 128
    %v1366 = vsel %vm1302, %v1122, 128
    %v1367 = vsel %vm1303, %v1122, 128
    %v1368 = vsel %vm1304, %v1122, 128
    %v1369 = vsel %vm1305, %v1122, 128
    %v1370 = vsel %vm1306, %v1122, 128
    %v1371 = vsel %vm1307, %v1122, 128
    %v1372 = vsel %vm1308, %v1122, 128
    %v1373 = vsel %vm1309, %v1122, 128
    %v1374 = vsel %vm1310, %v1122, 128
    %v1375 = vsel %vm1311, %v1122, 128
    %v1376 = vsel %vm1312, %v1122, 128
    %v1377 = vsel %vm1313, %v1122, 128
    %v1378 = vsel %vm1314, %v1122, 128
    %v1379 = vand.u32 %v1315, 65535
    %v1380 = vshra.s32 %v1315, 16
    %v1381 = vcvt.s32.f32 %v1379
    %v1382 = vcvt.s32.f32 %v1380
    %1383 = vmin.xlane.f32.xlu0 %v1382
    %v1384 = vpop.xlane.xlu0 %1383
    %vm1385 = vcmp.eq.f32.partialorder %v1382, %v1384
    %v1386 = vsel %vm1385, %v1381, inf
    %1387 = vmin.xlane.f32.xlu0 %v1386
    %v1388 = vpop.xlane.xlu0 %1387
    %v1389 = vcvt.f32.s32 %v1388
    %v1390 = vcvt.f32.s32 %v1384
    %v1391 = vshll.u32 %v1390, 16
    %v1392 = vadd.s32 %v1391, %v1389
    %v1393 = vand.u32 %v1316, 65535
    %v1394 = vshra.s32 %v1316, 16
    %v1395 = vcvt.s32.f32 %v1393
    %v1396 = vcvt.s32.f32 %v1394
    %1397 = vmin.xlane.f32.xlu0 %v1396
    %v1398 = vpop.xlane.xlu0 %1397
    %vm1399 = vcmp.eq.f32.partialorder %v1396, %v1398
    %v1400 = vsel %vm1399, %v1395, inf
    %1401 = vmin.xlane.f32.xlu0 %v1400
    %v1402 = vpop.xlane.xlu0 %1401
    %v1403 = vcvt.f32.s32 %v1402
    %v1404 = vcvt.f32.s32 %v1398
    %v1405 = vshll.u32 %v1404, 16
    %v1406 = vadd.s32 %v1405, %v1403
    %v1407 = vand.u32 %v1317, 65535
    %v1408 = vshra.s32 %v1317, 16
    %v1409 = vcvt.s32.f32 %v1407
    %v1410 = vcvt.s32.f32 %v1408
    %1411 = vmin.xlane.f32.xlu0 %v1410
    %v1412 = vpop.xlane.xlu0 %1411
    %vm1413 = vcmp.eq.f32.partialorder %v1410, %v1412
    %v1414 = vsel %vm1413, %v1409, inf
    %1415 = vmin.xlane.f32.xlu0 %v1414
    %v1416 = vpop.xlane.xlu0 %1415
    %v1417 = vcvt.f32.s32 %v1416
    %v1418 = vcvt.f32.s32 %v1412
    %v1419 = vshll.u32 %v1418, 16
    %v1420 = vadd.s32 %v1419, %v1417
    %v1421 = vand.u32 %v1318, 65535
    %v1422 = vshra.s32 %v1318, 16
    %v1423 = vcvt.s32.f32 %v1421
    %v1424 = vcvt.s32.f32 %v1422
    %1425 = vmin.xlane.f32.xlu0 %v1424
    %v1426 = vpop.xlane.xlu0 %1425
    %vm1427 = vcmp.eq.f32.partialorder %v1424, %v1426
    %v1428 = vsel %vm1427, %v1423, inf
    %1429 = vmin.xlane.f32.xlu0 %v1428
    %v1430 = vpop.xlane.xlu0 %1429
    %v1431 = vcvt.f32.s32 %v1430
    %v1432 = vcvt.f32.s32 %v1426
    %v1433 = vshll.u32 %v1432, 16
    %v1434 = vadd.s32 %v1433, %v1431
    %v1435 = vand.u32 %v1319, 65535
    %v1436 = vshra.s32 %v1319, 16
    %v1437 = vcvt.s32.f32 %v1435
    %v1438 = vcvt.s32.f32 %v1436
    %1439 = vmin.xlane.f32.xlu0 %v1438
    %v1440 = vpop.xlane.xlu0 %1439
    %vm1441 = vcmp.eq.f32.partialorder %v1438, %v1440
    %v1442 = vsel %vm1441, %v1437, inf
    %1443 = vmin.xlane.f32.xlu0 %v1442
    %v1444 = vpop.xlane.xlu0 %1443
    %v1445 = vcvt.f32.s32 %v1444
    %v1446 = vcvt.f32.s32 %v1440
    %v1447 = vshll.u32 %v1446, 16
    %v1448 = vadd.s32 %v1447, %v1445
    %v1449 = vand.u32 %v1320, 65535
    %v1450 = vshra.s32 %v1320, 16
    %v1451 = vcvt.s32.f32 %v1449
    %v1452 = vcvt.s32.f32 %v1450
    %1453 = vmin.xlane.f32.xlu0 %v1452
    %v1454 = vpop.xlane.xlu0 %1453
    %vm1455 = vcmp.eq.f32.partialorder %v1452, %v1454
    %v1456 = vsel %vm1455, %v1451, inf
    %1457 = vmin.xlane.f32.xlu0 %v1456
    %v1458 = vpop.xlane.xlu0 %1457
    %v1459 = vcvt.f32.s32 %v1458
    %v1460 = vcvt.f32.s32 %v1454
    %v1461 = vshll.u32 %v1460, 16
    %v1462 = vadd.s32 %v1461, %v1459
    %v1463 = vand.u32 %v1321, 65535
    %v1464 = vshra.s32 %v1321, 16
    %v1465 = vcvt.s32.f32 %v1463
    %v1466 = vcvt.s32.f32 %v1464
    %1467 = vmin.xlane.f32.xlu0 %v1466
    %v1468 = vpop.xlane.xlu0 %1467
    %vm1469 = vcmp.eq.f32.partialorder %v1466, %v1468
    %v1470 = vsel %vm1469, %v1465, inf
    %1471 = vmin.xlane.f32.xlu0 %v1470
    %v1472 = vpop.xlane.xlu0 %1471
    %v1473 = vcvt.f32.s32 %v1472
    %v1474 = vcvt.f32.s32 %v1468
    %v1475 = vshll.u32 %v1474, 16
    %v1476 = vadd.s32 %v1475, %v1473
    %v1477 = vand.u32 %v1322, 65535
    %v1478 = vshra.s32 %v1322, 16
    %v1479 = vcvt.s32.f32 %v1477
    %v1480 = vcvt.s32.f32 %v1478
    %1481 = vmin.xlane.f32.xlu0 %v1480
    %v1482 = vpop.xlane.xlu0 %1481
    %vm1483 = vcmp.eq.f32.partialorder %v1480, %v1482
    %v1484 = vsel %vm1483, %v1479, inf
    %1485 = vmin.xlane.f32.xlu0 %v1484
    %v1486 = vpop.xlane.xlu0 %1485
    %v1487 = vcvt.f32.s32 %v1486
    %v1488 = vcvt.f32.s32 %v1482
    %v1489 = vshll.u32 %v1488, 16
    %v1490 = vadd.s32 %v1489, %v1487
    %v1491 = vand.u32 %v1323, 65535
    %v1492 = vshra.s32 %v1323, 16
    %v1493 = vcvt.s32.f32 %v1491
    %v1494 = vcvt.s32.f32 %v1492
    %1495 = vmin.xlane.f32.xlu0 %v1494
    %v1496 = vpop.xlane.xlu0 %1495
    %vm1497 = vcmp.eq.f32.partialorder %v1494, %v1496
    %v1498 = vsel %vm1497, %v1493, inf
    %1499 = vmin.xlane.f32.xlu0 %v1498
    %v1500 = vpop.xlane.xlu0 %1499
    %v1501 = vcvt.f32.s32 %v1500
    %v1502 = vcvt.f32.s32 %v1496
    %v1503 = vshll.u32 %v1502, 16
    %v1504 = vadd.s32 %v1503, %v1501
    %v1505 = vand.u32 %v1324, 65535
    %v1506 = vshra.s32 %v1324, 16
    %v1507 = vcvt.s32.f32 %v1505
    %v1508 = vcvt.s32.f32 %v1506
    %1509 = vmin.xlane.f32.xlu0 %v1508
    %v1510 = vpop.xlane.xlu0 %1509
    %vm1511 = vcmp.eq.f32.partialorder %v1508, %v1510
    %v1512 = vsel %vm1511, %v1507, inf
    %1513 = vmin.xlane.f32.xlu0 %v1512
    %v1514 = vpop.xlane.xlu0 %1513
    %v1515 = vcvt.f32.s32 %v1514
    %v1516 = vcvt.f32.s32 %v1510
    %v1517 = vshll.u32 %v1516, 16
    %v1518 = vadd.s32 %v1517, %v1515
    %v1519 = vand.u32 %v1325, 65535
    %v1520 = vshra.s32 %v1325, 16
    %v1521 = vcvt.s32.f32 %v1519
    %v1522 = vcvt.s32.f32 %v1520
    %1523 = vmin.xlane.f32.xlu0 %v1522
    %v1524 = vpop.xlane.xlu0 %1523
    %vm1525 = vcmp.eq.f32.partialorder %v1522, %v1524
    %v1526 = vsel %vm1525, %v1521, inf
    %1527 = vmin.xlane.f32.xlu0 %v1526
    %v1528 = vpop.xlane.xlu0 %1527
    %v1529 = vcvt.f32.s32 %v1528
    %v1530 = vcvt.f32.s32 %v1524
    %v1531 = vshll.u32 %v1530, 16
    %v1532 = vadd.s32 %v1531, %v1529
    %v1533 = vand.u32 %v1326, 65535
    %v1534 = vshra.s32 %v1326, 16
    %v1535 = vcvt.s32.f32 %v1533
    %v1536 = vcvt.s32.f32 %v1534
    %1537 = vmin.xlane.f32.xlu0 %v1536
    %v1538 = vpop.xlane.xlu0 %1537
    %vm1539 = vcmp.eq.f32.partialorder %v1536, %v1538
    %v1540 = vsel %vm1539, %v1535, inf
    %1541 = vmin.xlane.f32.xlu0 %v1540
    %v1542 = vpop.xlane.xlu0 %1541
    %v1543 = vcvt.f32.s32 %v1542
    %v1544 = vcvt.f32.s32 %v1538
    %v1545 = vshll.u32 %v1544, 16
    %v1546 = vadd.s32 %v1545, %v1543
    %v1547 = vand.u32 %v1327, 65535
    %v1548 = vshra.s32 %v1327, 16
    %v1549 = vcvt.s32.f32 %v1547
    %v1550 = vcvt.s32.f32 %v1548
    %1551 = vmin.xlane.f32.xlu0 %v1550
    %v1552 = vpop.xlane.xlu0 %1551
    %vm1553 = vcmp.eq.f32.partialorder %v1550, %v1552
    %v1554 = vsel %vm1553, %v1549, inf
    %1555 = vmin.xlane.f32.xlu0 %v1554
    %v1556 = vpop.xlane.xlu0 %1555
    %v1557 = vcvt.f32.s32 %v1556
    %v1558 = vcvt.f32.s32 %v1552
    %v1559 = vshll.u32 %v1558, 16
    %v1560 = vadd.s32 %v1559, %v1557
    %v1561 = vand.u32 %v1328, 65535
    %v1562 = vshra.s32 %v1328, 16
    %v1563 = vcvt.s32.f32 %v1561
    %v1564 = vcvt.s32.f32 %v1562
    %1565 = vmin.xlane.f32.xlu0 %v1564
    %v1566 = vpop.xlane.xlu0 %1565
    %vm1567 = vcmp.eq.f32.partialorder %v1564, %v1566
    %v1568 = vsel %vm1567, %v1563, inf
    %1569 = vmin.xlane.f32.xlu0 %v1568
    %v1570 = vpop.xlane.xlu0 %1569
    %v1571 = vcvt.f32.s32 %v1570
    %v1572 = vcvt.f32.s32 %v1566
    %v1573 = vshll.u32 %v1572, 16
    %v1574 = vadd.s32 %v1573, %v1571
    %v1575 = vand.u32 %v1329, 65535
    %v1576 = vshra.s32 %v1329, 16
    %v1577 = vcvt.s32.f32 %v1575
    %v1578 = vcvt.s32.f32 %v1576
    %1579 = vmin.xlane.f32.xlu0 %v1578
    %v1580 = vpop.xlane.xlu0 %1579
    %vm1581 = vcmp.eq.f32.partialorder %v1578, %v1580
    %v1582 = vsel %vm1581, %v1577, inf
    %1583 = vmin.xlane.f32.xlu0 %v1582
    %v1584 = vpop.xlane.xlu0 %1583
    %v1585 = vcvt.f32.s32 %v1584
    %v1586 = vcvt.f32.s32 %v1580
    %v1587 = vshll.u32 %v1586, 16
    %v1588 = vadd.s32 %v1587, %v1585
    %v1589 = vand.u32 %v1330, 65535
    %v1590 = vshra.s32 %v1330, 16
    %v1591 = vcvt.s32.f32 %v1589
    %v1592 = vcvt.s32.f32 %v1590
    %1593 = vmin.xlane.f32.xlu0 %v1592
    %v1594 = vpop.xlane.xlu0 %1593
    %vm1595 = vcmp.eq.f32.partialorder %v1592, %v1594
    %v1596 = vsel %vm1595, %v1591, inf
    %1597 = vmin.xlane.f32.xlu0 %v1596
    %v1598 = vpop.xlane.xlu0 %1597
    %v1599 = vcvt.f32.s32 %v1598
    %v1600 = vcvt.f32.s32 %v1594
    %v1601 = vshll.u32 %v1600, 16
    %v1602 = vadd.s32 %v1601, %v1599
    %v1603 = vand.u32 %v1331, 65535
    %v1604 = vshra.s32 %v1331, 16
    %v1605 = vcvt.s32.f32 %v1603
    %v1606 = vcvt.s32.f32 %v1604
    %1607 = vmin.xlane.f32.xlu0 %v1606
    %v1608 = vpop.xlane.xlu0 %1607
    %vm1609 = vcmp.eq.f32.partialorder %v1606, %v1608
    %v1610 = vsel %vm1609, %v1605, inf
    %1611 = vmin.xlane.f32.xlu0 %v1610
    %v1612 = vpop.xlane.xlu0 %1611
    %v1613 = vcvt.f32.s32 %v1612
    %v1614 = vcvt.f32.s32 %v1608
    %v1615 = vshll.u32 %v1614, 16
    %v1616 = vadd.s32 %v1615, %v1613
    %v1617 = vand.u32 %v1332, 65535
    %v1618 = vshra.s32 %v1332, 16
    %v1619 = vcvt.s32.f32 %v1617
    %v1620 = vcvt.s32.f32 %v1618
    %1621 = vmin.xlane.f32.xlu0 %v1620
    %v1622 = vpop.xlane.xlu0 %1621
    %vm1623 = vcmp.eq.f32.partialorder %v1620, %v1622
    %v1624 = vsel %vm1623, %v1619, inf
    %1625 = vmin.xlane.f32.xlu0 %v1624
    %v1626 = vpop.xlane.xlu0 %1625
    %v1627 = vcvt.f32.s32 %v1626
    %v1628 = vcvt.f32.s32 %v1622
    %v1629 = vshll.u32 %v1628, 16
    %v1630 = vadd.s32 %v1629, %v1627
    %v1631 = vand.u32 %v1333, 65535
    %v1632 = vshra.s32 %v1333, 16
    %v1633 = vcvt.s32.f32 %v1631
    %v1634 = vcvt.s32.f32 %v1632
    %1635 = vmin.xlane.f32.xlu0 %v1634
    %v1636 = vpop.xlane.xlu0 %1635
    %vm1637 = vcmp.eq.f32.partialorder %v1634, %v1636
    %v1638 = vsel %vm1637, %v1633, inf
    %1639 = vmin.xlane.f32.xlu0 %v1638
    %v1640 = vpop.xlane.xlu0 %1639
    %v1641 = vcvt.f32.s32 %v1640
    %v1642 = vcvt.f32.s32 %v1636
    %v1643 = vshll.u32 %v1642, 16
    %v1644 = vadd.s32 %v1643, %v1641
    %v1645 = vand.u32 %v1334, 65535
    %v1646 = vshra.s32 %v1334, 16
    %v1647 = vcvt.s32.f32 %v1645
    %v1648 = vcvt.s32.f32 %v1646
    %1649 = vmin.xlane.f32.xlu0 %v1648
    %v1650 = vpop.xlane.xlu0 %1649
    %vm1651 = vcmp.eq.f32.partialorder %v1648, %v1650
    %v1652 = vsel %vm1651, %v1647, inf
    %1653 = vmin.xlane.f32.xlu0 %v1652
    %v1654 = vpop.xlane.xlu0 %1653
    %v1655 = vcvt.f32.s32 %v1654
    %v1656 = vcvt.f32.s32 %v1650
    %v1657 = vshll.u32 %v1656, 16
    %v1658 = vadd.s32 %v1657, %v1655
    %v1659 = vand.u32 %v1335, 65535
    %v1660 = vshra.s32 %v1335, 16
    %v1661 = vcvt.s32.f32 %v1659
    %v1662 = vcvt.s32.f32 %v1660
    %1663 = vmin.xlane.f32.xlu0 %v1662
    %v1664 = vpop.xlane.xlu0 %1663
    %vm1665 = vcmp.eq.f32.partialorder %v1662, %v1664
    %v1666 = vsel %vm1665, %v1661, inf
    %1667 = vmin.xlane.f32.xlu0 %v1666
    %v1668 = vpop.xlane.xlu0 %1667
    %v1669 = vcvt.f32.s32 %v1668
    %v1670 = vcvt.f32.s32 %v1664
    %v1671 = vshll.u32 %v1670, 16
    %v1672 = vadd.s32 %v1671, %v1669
    %v1673 = vand.u32 %v1336, 65535
    %v1674 = vshra.s32 %v1336, 16
    %v1675 = vcvt.s32.f32 %v1673
    %v1676 = vcvt.s32.f32 %v1674
    %1677 = vmin.xlane.f32.xlu0 %v1676
    %v1678 = vpop.xlane.xlu0 %1677
    %vm1679 = vcmp.eq.f32.partialorder %v1676, %v1678
    %v1680 = vsel %vm1679, %v1675, inf
    %1681 = vmin.xlane.f32.xlu0 %v1680
    %v1682 = vpop.xlane.xlu0 %1681
    %v1683 = vcvt.f32.s32 %v1682
    %v1684 = vcvt.f32.s32 %v1678
    %v1685 = vshll.u32 %v1684, 16
    %v1686 = vadd.s32 %v1685, %v1683
    %v1687 = vand.u32 %v1337, 65535
    %v1688 = vshra.s32 %v1337, 16
    %v1689 = vcvt.s32.f32 %v1687
    %v1690 = vcvt.s32.f32 %v1688
    %1691 = vmin.xlane.f32.xlu0 %v1690
    %v1692 = vpop.xlane.xlu0 %1691
    %vm1693 = vcmp.eq.f32.partialorder %v1690, %v1692
    %v1694 = vsel %vm1693, %v1689, inf
    %1695 = vmin.xlane.f32.xlu0 %v1694
    %v1696 = vpop.xlane.xlu0 %1695
    %v1697 = vcvt.f32.s32 %v1696
    %v1698 = vcvt.f32.s32 %v1692
    %v1699 = vshll.u32 %v1698, 16
    %v1700 = vadd.s32 %v1699, %v1697
    %v1701 = vand.u32 %v1338, 65535
    %v1702 = vshra.s32 %v1338, 16
    %v1703 = vcvt.s32.f32 %v1701
    %v1704 = vcvt.s32.f32 %v1702
    %1705 = vmin.xlane.f32.xlu0 %v1704
    %v1706 = vpop.xlane.xlu0 %1705
    %vm1707 = vcmp.eq.f32.partialorder %v1704, %v1706
    %v1708 = vsel %vm1707, %v1703, inf
    %1709 = vmin.xlane.f32.xlu0 %v1708
    %v1710 = vpop.xlane.xlu0 %1709
    %v1711 = vcvt.f32.s32 %v1710
    %v1712 = vcvt.f32.s32 %v1706
    %v1713 = vshll.u32 %v1712, 16
    %v1714 = vadd.s32 %v1713, %v1711
    %v1715 = vand.u32 %v1339, 65535
    %v1716 = vshra.s32 %v1339, 16
    %v1717 = vcvt.s32.f32 %v1715
    %v1718 = vcvt.s32.f32 %v1716
    %1719 = vmin.xlane.f32.xlu0 %v1718
    %v1720 = vpop.xlane.xlu0 %1719
    %vm1721 = vcmp.eq.f32.partialorder %v1718, %v1720
    %v1722 = vsel %vm1721, %v1717, inf
    %1723 = vmin.xlane.f32.xlu0 %v1722
    %v1724 = vpop.xlane.xlu0 %1723
    %v1725 = vcvt.f32.s32 %v1724
    %v1726 = vcvt.f32.s32 %v1720
    %v1727 = vshll.u32 %v1726, 16
    %v1728 = vadd.s32 %v1727, %v1725
    %v1729 = vand.u32 %v1340, 65535
    %v1730 = vshra.s32 %v1340, 16
    %v1731 = vcvt.s32.f32 %v1729
    %v1732 = vcvt.s32.f32 %v1730
    %1733 = vmin.xlane.f32.xlu0 %v1732
    %v1734 = vpop.xlane.xlu0 %1733
    %vm1735 = vcmp.eq.f32.partialorder %v1732, %v1734
    %v1736 = vsel %vm1735, %v1731, inf
    %1737 = vmin.xlane.f32.xlu0 %v1736
    %v1738 = vpop.xlane.xlu0 %1737
    %v1739 = vcvt.f32.s32 %v1738
    %v1740 = vcvt.f32.s32 %v1734
    %v1741 = vshll.u32 %v1740, 16
    %v1742 = vadd.s32 %v1741, %v1739
    %v1743 = vand.u32 %v1341, 65535
    %v1744 = vshra.s32 %v1341, 16
    %v1745 = vcvt.s32.f32 %v1743
    %v1746 = vcvt.s32.f32 %v1744
    %1747 = vmin.xlane.f32.xlu0 %v1746
    %v1748 = vpop.xlane.xlu0 %1747
    %vm1749 = vcmp.eq.f32.partialorder %v1746, %v1748
    %v1750 = vsel %vm1749, %v1745, inf
    %1751 = vmin.xlane.f32.xlu0 %v1750
    %v1752 = vpop.xlane.xlu0 %1751
    %v1753 = vcvt.f32.s32 %v1752
    %v1754 = vcvt.f32.s32 %v1748
    %v1755 = vshll.u32 %v1754, 16
    %v1756 = vadd.s32 %v1755, %v1753
    %v1757 = vand.u32 %v1342, 65535
    %v1758 = vshra.s32 %v1342, 16
    %v1759 = vcvt.s32.f32 %v1757
    %v1760 = vcvt.s32.f32 %v1758
    %1761 = vmin.xlane.f32.xlu0 %v1760
    %v1762 = vpop.xlane.xlu0 %1761
    %vm1763 = vcmp.eq.f32.partialorder %v1760, %v1762
    %v1764 = vsel %vm1763, %v1759, inf
    %1765 = vmin.xlane.f32.xlu0 %v1764
    %v1766 = vpop.xlane.xlu0 %1765
    %v1767 = vcvt.f32.s32 %v1766
    %v1768 = vcvt.f32.s32 %v1762
    %v1769 = vshll.u32 %v1768, 16
    %v1770 = vadd.s32 %v1769, %v1767
    %v1771 = vand.u32 %v1343, 65535
    %v1772 = vshra.s32 %v1343, 16
    %v1773 = vcvt.s32.f32 %v1771
    %v1774 = vcvt.s32.f32 %v1772
    %1775 = vmin.xlane.f32.xlu0 %v1774
    %v1776 = vpop.xlane.xlu0 %1775
    %vm1777 = vcmp.eq.f32.partialorder %v1774, %v1776
    %v1778 = vsel %vm1777, %v1773, inf
    %1779 = vmin.xlane.f32.xlu0 %v1778
    %v1780 = vpop.xlane.xlu0 %1779
    %v1781 = vcvt.f32.s32 %v1780
    %v1782 = vcvt.f32.s32 %v1776
    %v1783 = vshll.u32 %v1782, 16
    %v1784 = vadd.s32 %v1783, %v1781
    %v1785 = vand.u32 %v1344, 65535
    %v1786 = vshra.s32 %v1344, 16
    %v1787 = vcvt.s32.f32 %v1785
    %v1788 = vcvt.s32.f32 %v1786
    %1789 = vmin.xlane.f32.xlu0 %v1788
    %v1790 = vpop.xlane.xlu0 %1789
    %vm1791 = vcmp.eq.f32.partialorder %v1788, %v1790
    %v1792 = vsel %vm1791, %v1787, inf
    %1793 = vmin.xlane.f32.xlu0 %v1792
    %v1794 = vpop.xlane.xlu0 %1793
    %v1795 = vcvt.f32.s32 %v1794
    %v1796 = vcvt.f32.s32 %v1790
    %v1797 = vshll.u32 %v1796, 16
    %v1798 = vadd.s32 %v1797, %v1795
    %v1799 = vand.u32 %v1345, 65535
    %v1800 = vshra.s32 %v1345, 16
    %v1801 = vcvt.s32.f32 %v1799
    %v1802 = vcvt.s32.f32 %v1800
    %1803 = vmin.xlane.f32.xlu0 %v1802
    %v1804 = vpop.xlane.xlu0 %1803
    %vm1805 = vcmp.eq.f32.partialorder %v1802, %v1804
    %v1806 = vsel %vm1805, %v1801, inf
    %1807 = vmin.xlane.f32.xlu0 %v1806
    %v1808 = vpop.xlane.xlu0 %1807
    %v1809 = vcvt.f32.s32 %v1808
    %v1810 = vcvt.f32.s32 %v1804
    %v1811 = vshll.u32 %v1810, 16
    %v1812 = vadd.s32 %v1811, %v1809
    %v1813 = vand.u32 %v1346, 65535
    %v1814 = vshra.s32 %v1346, 16
    %v1815 = vcvt.s32.f32 %v1813
    %v1816 = vcvt.s32.f32 %v1814
    %1817 = vmin.xlane.f32.xlu0 %v1816
    %v1818 = vpop.xlane.xlu0 %1817
    %vm1819 = vcmp.eq.f32.partialorder %v1816, %v1818
    %v1820 = vsel %vm1819, %v1815, inf
    %1821 = vmin.xlane.f32.xlu0 %v1820
    %v1822 = vpop.xlane.xlu0 %1821
    %v1823 = vcvt.f32.s32 %v1822
    %v1824 = vcvt.f32.s32 %v1818
    %v1825 = vshll.u32 %v1824, 16
    %v1826 = vadd.s32 %v1825, %v1823
    %v1827 = vand.u32 %v1347, 65535
    %v1828 = vshra.s32 %v1347, 16
    %v1829 = vcvt.s32.f32 %v1827
    %v1830 = vcvt.s32.f32 %v1828
    %1831 = vmin.xlane.f32.xlu0 %v1830
    %v1832 = vpop.xlane.xlu0 %1831
    %vm1833 = vcmp.eq.f32.partialorder %v1830, %v1832
    %v1834 = vsel %vm1833, %v1829, inf
    %1835 = vmin.xlane.f32.xlu0 %v1834
    %v1836 = vpop.xlane.xlu0 %1835
    %v1837 = vcvt.f32.s32 %v1836
    %v1838 = vcvt.f32.s32 %v1832
    %v1839 = vshll.u32 %v1838, 16
    %v1840 = vadd.s32 %v1839, %v1837
    %v1841 = vand.u32 %v1348, 65535
    %v1842 = vshra.s32 %v1348, 16
    %v1843 = vcvt.s32.f32 %v1841
    %v1844 = vcvt.s32.f32 %v1842
    %1845 = vmin.xlane.f32.xlu0 %v1844
    %v1846 = vpop.xlane.xlu0 %1845
    %vm1847 = vcmp.eq.f32.partialorder %v1844, %v1846
    %v1848 = vsel %vm1847, %v1843, inf
    %1849 = vmin.xlane.f32.xlu0 %v1848
    %v1850 = vpop.xlane.xlu0 %1849
    %v1851 = vcvt.f32.s32 %v1850
    %v1852 = vcvt.f32.s32 %v1846
    %v1853 = vshll.u32 %v1852, 16
    %v1854 = vadd.s32 %v1853, %v1851
    %v1855 = vand.u32 %v1349, 65535
    %v1856 = vshra.s32 %v1349, 16
    %v1857 = vcvt.s32.f32 %v1855
    %v1858 = vcvt.s32.f32 %v1856
    %1859 = vmin.xlane.f32.xlu0 %v1858
    %v1860 = vpop.xlane.xlu0 %1859
    %vm1861 = vcmp.eq.f32.partialorder %v1858, %v1860
    %v1862 = vsel %vm1861, %v1857, inf
    %1863 = vmin.xlane.f32.xlu0 %v1862
    %v1864 = vpop.xlane.xlu0 %1863
    %v1865 = vcvt.f32.s32 %v1864
    %v1866 = vcvt.f32.s32 %v1860
    %v1867 = vshll.u32 %v1866, 16
    %v1868 = vadd.s32 %v1867, %v1865
    %v1869 = vand.u32 %v1350, 65535
    %v1870 = vshra.s32 %v1350, 16
    %v1871 = vcvt.s32.f32 %v1869
    %v1872 = vcvt.s32.f32 %v1870
    %1873 = vmin.xlane.f32.xlu0 %v1872
    %v1874 = vpop.xlane.xlu0 %1873
    %vm1875 = vcmp.eq.f32.partialorder %v1872, %v1874
    %v1876 = vsel %vm1875, %v1871, inf
    %1877 = vmin.xlane.f32.xlu0 %v1876
    %v1878 = vpop.xlane.xlu0 %1877
    %v1879 = vcvt.f32.s32 %v1878
    %v1880 = vcvt.f32.s32 %v1874
    %v1881 = vshll.u32 %v1880, 16
    %v1882 = vadd.s32 %v1881, %v1879
    %v1883 = vand.u32 %v1351, 65535
    %v1884 = vshra.s32 %v1351, 16
    %v1885 = vcvt.s32.f32 %v1883
    %v1886 = vcvt.s32.f32 %v1884
    %1887 = vmin.xlane.f32.xlu0 %v1886
    %v1888 = vpop.xlane.xlu0 %1887
    %vm1889 = vcmp.eq.f32.partialorder %v1886, %v1888
    %v1890 = vsel %vm1889, %v1885, inf
    %1891 = vmin.xlane.f32.xlu0 %v1890
    %v1892 = vpop.xlane.xlu0 %1891
    %v1893 = vcvt.f32.s32 %v1892
    %v1894 = vcvt.f32.s32 %v1888
    %v1895 = vshll.u32 %v1894, 16
    %v1896 = vadd.s32 %v1895, %v1893
    %v1897 = vand.u32 %v1352, 65535
    %v1898 = vshra.s32 %v1352, 16
    %v1899 = vcvt.s32.f32 %v1897
    %v1900 = vcvt.s32.f32 %v1898
    %1901 = vmin.xlane.f32.xlu0 %v1900
    %v1902 = vpop.xlane.xlu0 %1901
    %vm1903 = vcmp.eq.f32.partialorder %v1900, %v1902
    %v1904 = vsel %vm1903, %v1899, inf
    %1905 = vmin.xlane.f32.xlu0 %v1904
    %v1906 = vpop.xlane.xlu0 %1905
    %v1907 = vcvt.f32.s32 %v1906
    %v1908 = vcvt.f32.s32 %v1902
    %v1909 = vshll.u32 %v1908, 16
    %v1910 = vadd.s32 %v1909, %v1907
    %v1911 = vand.u32 %v1353, 65535
    %v1912 = vshra.s32 %v1353, 16
    %v1913 = vcvt.s32.f32 %v1911
    %v1914 = vcvt.s32.f32 %v1912
    %1915 = vmin.xlane.f32.xlu0 %v1914
    %v1916 = vpop.xlane.xlu0 %1915
    %vm1917 = vcmp.eq.f32.partialorder %v1914, %v1916
    %v1918 = vsel %vm1917, %v1913, inf
    %1919 = vmin.xlane.f32.xlu0 %v1918
    %v1920 = vpop.xlane.xlu0 %1919
    %v1921 = vcvt.f32.s32 %v1920
    %v1922 = vcvt.f32.s32 %v1916
    %v1923 = vshll.u32 %v1922, 16
    %v1924 = vadd.s32 %v1923, %v1921
    %v1925 = vand.u32 %v1354, 65535
    %v1926 = vshra.s32 %v1354, 16
    %v1927 = vcvt.s32.f32 %v1925
    %v1928 = vcvt.s32.f32 %v1926
    %1929 = vmin.xlane.f32.xlu0 %v1928
    %v1930 = vpop.xlane.xlu0 %1929
    %vm1931 = vcmp.eq.f32.partialorder %v1928, %v1930
    %v1932 = vsel %vm1931, %v1927, inf
    %1933 = vmin.xlane.f32.xlu0 %v1932
    %v1934 = vpop.xlane.xlu0 %1933
    %v1935 = vcvt.f32.s32 %v1934
    %v1936 = vcvt.f32.s32 %v1930
    %v1937 = vshll.u32 %v1936, 16
    %v1938 = vadd.s32 %v1937, %v1935
    %v1939 = vand.u32 %v1355, 65535
    %v1940 = vshra.s32 %v1355, 16
    %v1941 = vcvt.s32.f32 %v1939
    %v1942 = vcvt.s32.f32 %v1940
    %1943 = vmin.xlane.f32.xlu0 %v1942
    %v1944 = vpop.xlane.xlu0 %1943
    %vm1945 = vcmp.eq.f32.partialorder %v1942, %v1944
    %v1946 = vsel %vm1945, %v1941, inf
    %1947 = vmin.xlane.f32.xlu0 %v1946
    %v1948 = vpop.xlane.xlu0 %1947
    %v1949 = vcvt.f32.s32 %v1948
    %v1950 = vcvt.f32.s32 %v1944
    %v1951 = vshll.u32 %v1950, 16
    %v1952 = vadd.s32 %v1951, %v1949
    %v1953 = vand.u32 %v1356, 65535
    %v1954 = vshra.s32 %v1356, 16
    %v1955 = vcvt.s32.f32 %v1953
    %v1956 = vcvt.s32.f32 %v1954
    %1957 = vmin.xlane.f32.xlu0 %v1956
    %v1958 = vpop.xlane.xlu0 %1957
    %vm1959 = vcmp.eq.f32.partialorder %v1956, %v1958
    %v1960 = vsel %vm1959, %v1955, inf
    %1961 = vmin.xlane.f32.xlu0 %v1960
    %v1962 = vpop.xlane.xlu0 %1961
    %v1963 = vcvt.f32.s32 %v1962
    %v1964 = vcvt.f32.s32 %v1958
    %v1965 = vshll.u32 %v1964, 16
    %v1966 = vadd.s32 %v1965, %v1963
    %v1967 = vand.u32 %v1357, 65535
    %v1968 = vshra.s32 %v1357, 16
    %v1969 = vcvt.s32.f32 %v1967
    %v1970 = vcvt.s32.f32 %v1968
    %1971 = vmin.xlane.f32.xlu0 %v1970
    %v1972 = vpop.xlane.xlu0 %1971
    %vm1973 = vcmp.eq.f32.partialorder %v1970, %v1972
    %v1974 = vsel %vm1973, %v1969, inf
    %1975 = vmin.xlane.f32.xlu0 %v1974
    %v1976 = vpop.xlane.xlu0 %1975
    %v1977 = vcvt.f32.s32 %v1976
    %v1978 = vcvt.f32.s32 %v1972
    %v1979 = vshll.u32 %v1978, 16
    %v1980 = vadd.s32 %v1979, %v1977
    %v1981 = vand.u32 %v1358, 65535
    %v1982 = vshra.s32 %v1358, 16
    %v1983 = vcvt.s32.f32 %v1981
    %v1984 = vcvt.s32.f32 %v1982
    %1985 = vmin.xlane.f32.xlu0 %v1984
    %v1986 = vpop.xlane.xlu0 %1985
    %vm1987 = vcmp.eq.f32.partialorder %v1984, %v1986
    %v1988 = vsel %vm1987, %v1983, inf
    %1989 = vmin.xlane.f32.xlu0 %v1988
    %v1990 = vpop.xlane.xlu0 %1989
    %v1991 = vcvt.f32.s32 %v1990
    %v1992 = vcvt.f32.s32 %v1986
    %v1993 = vshll.u32 %v1992, 16
    %v1994 = vadd.s32 %v1993, %v1991
    %v1995 = vand.u32 %v1359, 65535
    %v1996 = vshra.s32 %v1359, 16
    %v1997 = vcvt.s32.f32 %v1995
    %v1998 = vcvt.s32.f32 %v1996
    %1999 = vmin.xlane.f32.xlu0 %v1998
    %v2000 = vpop.xlane.xlu0 %1999
    %vm2001 = vcmp.eq.f32.partialorder %v1998, %v2000
    %v2002 = vsel %vm2001, %v1997, inf
    %2003 = vmin.xlane.f32.xlu0 %v2002
    %v2004 = vpop.xlane.xlu0 %2003
    %v2005 = vcvt.f32.s32 %v2004
    %v2006 = vcvt.f32.s32 %v2000
    %v2007 = vshll.u32 %v2006, 16
    %v2008 = vadd.s32 %v2007, %v2005
    %v2009 = vand.u32 %v1360, 65535
    %v2010 = vshra.s32 %v1360, 16
    %v2011 = vcvt.s32.f32 %v2009
    %v2012 = vcvt.s32.f32 %v2010
    %2013 = vmin.xlane.f32.xlu0 %v2012
    %v2014 = vpop.xlane.xlu0 %2013
    %vm2015 = vcmp.eq.f32.partialorder %v2012, %v2014
    %v2016 = vsel %vm2015, %v2011, inf
    %2017 = vmin.xlane.f32.xlu0 %v2016
    %v2018 = vpop.xlane.xlu0 %2017
    %v2019 = vcvt.f32.s32 %v2018
    %v2020 = vcvt.f32.s32 %v2014
    %v2021 = vshll.u32 %v2020, 16
    %v2022 = vadd.s32 %v2021, %v2019
    %v2023 = vand.u32 %v1361, 65535
    %v2024 = vshra.s32 %v1361, 16
    %v2025 = vcvt.s32.f32 %v2023
    %v2026 = vcvt.s32.f32 %v2024
    %2027 = vmin.xlane.f32.xlu0 %v2026
    %v2028 = vpop.xlane.xlu0 %2027
    %vm2029 = vcmp.eq.f32.partialorder %v2026, %v2028
    %v2030 = vsel %vm2029, %v2025, inf
    %2031 = vmin.xlane.f32.xlu0 %v2030
    %v2032 = vpop.xlane.xlu0 %2031
    %v2033 = vcvt.f32.s32 %v2032
    %v2034 = vcvt.f32.s32 %v2028
    %v2035 = vshll.u32 %v2034, 16
    %v2036 = vadd.s32 %v2035, %v2033
    %v2037 = vand.u32 %v1362, 65535
    %v2038 = vshra.s32 %v1362, 16
    %v2039 = vcvt.s32.f32 %v2037
    %v2040 = vcvt.s32.f32 %v2038
    %2041 = vmin.xlane.f32.xlu0 %v2040
    %v2042 = vpop.xlane.xlu0 %2041
    %vm2043 = vcmp.eq.f32.partialorder %v2040, %v2042
    %v2044 = vsel %vm2043, %v2039, inf
    %2045 = vmin.xlane.f32.xlu0 %v2044
    %v2046 = vpop.xlane.xlu0 %2045
    %v2047 = vcvt.f32.s32 %v2046
    %v2048 = vcvt.f32.s32 %v2042
    %v2049 = vshll.u32 %v2048, 16
    %v2050 = vadd.s32 %v2049, %v2047
    %v2051 = vand.u32 %v1363, 65535
    %v2052 = vshra.s32 %v1363, 16
    %v2053 = vcvt.s32.f32 %v2051
    %v2054 = vcvt.s32.f32 %v2052
    %2055 = vmin.xlane.f32.xlu0 %v2054
    %v2056 = vpop.xlane.xlu0 %2055
    %vm2057 = vcmp.eq.f32.partialorder %v2054, %v2056
    %v2058 = vsel %vm2057, %v2053, inf
    %2059 = vmin.xlane.f32.xlu0 %v2058
    %v2060 = vpop.xlane.xlu0 %2059
    %v2061 = vcvt.f32.s32 %v2060
    %v2062 = vcvt.f32.s32 %v2056
    %v2063 = vshll.u32 %v2062, 16
    %v2064 = vadd.s32 %v2063, %v2061
    %v2065 = vand.u32 %v1364, 65535
    %v2066 = vshra.s32 %v1364, 16
    %v2067 = vcvt.s32.f32 %v2065
    %v2068 = vcvt.s32.f32 %v2066
    %2069 = vmin.xlane.f32.xlu0 %v2068
    %v2070 = vpop.xlane.xlu0 %2069
    %vm2071 = vcmp.eq.f32.partialorder %v2068, %v2070
    %v2072 = vsel %vm2071, %v2067, inf
    %2073 = vmin.xlane.f32.xlu0 %v2072
    %v2074 = vpop.xlane.xlu0 %2073
    %v2075 = vcvt.f32.s32 %v2074
    %v2076 = vcvt.f32.s32 %v2070
    %v2077 = vshll.u32 %v2076, 16
    %v2078 = vadd.s32 %v2077, %v2075
    %v2079 = vand.u32 %v1365, 65535
    %v2080 = vshra.s32 %v1365, 16
    %v2081 = vcvt.s32.f32 %v2079
    %v2082 = vcvt.s32.f32 %v2080
    %2083 = vmin.xlane.f32.xlu0 %v2082
    %v2084 = vpop.xlane.xlu0 %2083
    %vm2085 = vcmp.eq.f32.partialorder %v2082, %v2084
    %v2086 = vsel %vm2085, %v2081, inf
    %2087 = vmin.xlane.f32.xlu0 %v2086
    %v2088 = vpop.xlane.xlu0 %2087
    %v2089 = vcvt.f32.s32 %v2088
    %v2090 = vcvt.f32.s32 %v2084
    %v2091 = vshll.u32 %v2090, 16
    %v2092 = vadd.s32 %v2091, %v2089
    %v2093 = vand.u32 %v1366, 65535
    %v2094 = vshra.s32 %v1366, 16
    %v2095 = vcvt.s32.f32 %v2093
    %v2096 = vcvt.s32.f32 %v2094
    %2097 = vmin.xlane.f32.xlu0 %v2096
    %v2098 = vpop.xlane.xlu0 %2097
    %vm2099 = vcmp.eq.f32.partialorder %v2096, %v2098
    %v2100 = vsel %vm2099, %v2095, inf
    %2101 = vmin.xlane.f32.xlu0 %v2100
    %v2102 = vpop.xlane.xlu0 %2101
    %v2103 = vcvt.f32.s32 %v2102
    %v2104 = vcvt.f32.s32 %v2098
    %v2105 = vshll.u32 %v2104, 16
    %v2106 = vadd.s32 %v2105, %v2103
    %v2107 = vand.u32 %v1367, 65535
    %v2108 = vshra.s32 %v1367, 16
    %v2109 = vcvt.s32.f32 %v2107
    %v2110 = vcvt.s32.f32 %v2108
    %2111 = vmin.xlane.f32.xlu0 %v2110
    %v2112 = vpop.xlane.xlu0 %2111
    %vm2113 = vcmp.eq.f32.partialorder %v2110, %v2112
    %v2114 = vsel %vm2113, %v2109, inf
    %2115 = vmin.xlane.f32.xlu0 %v2114
    %v2116 = vpop.xlane.xlu0 %2115
    %v2117 = vcvt.f32.s32 %v2116
    %v2118 = vcvt.f32.s32 %v2112
    %v2119 = vshll.u32 %v2118, 16
    %v2120 = vadd.s32 %v2119, %v2117
    %v2121 = vand.u32 %v1368, 65535
    %v2122 = vshra.s32 %v1368, 16
    %v2123 = vcvt.s32.f32 %v2121
    %v2124 = vcvt.s32.f32 %v2122
    %2125 = vmin.xlane.f32.xlu0 %v2124
    %v2126 = vpop.xlane.xlu0 %2125
    %vm2127 = vcmp.eq.f32.partialorder %v2124, %v2126
    %v2128 = vsel %vm2127, %v2123, inf
    %2129 = vmin.xlane.f32.xlu0 %v2128
    %v2130 = vpop.xlane.xlu0 %2129
    %v2131 = vcvt.f32.s32 %v2130
    %v2132 = vcvt.f32.s32 %v2126
    %v2133 = vshll.u32 %v2132, 16
    %v2134 = vadd.s32 %v2133, %v2131
    %v2135 = vand.u32 %v1369, 65535
    %v2136 = vshra.s32 %v1369, 16
    %v2137 = vcvt.s32.f32 %v2135
    %v2138 = vcvt.s32.f32 %v2136
    %2139 = vmin.xlane.f32.xlu0 %v2138
    %v2140 = vpop.xlane.xlu0 %2139
    %vm2141 = vcmp.eq.f32.partialorder %v2138, %v2140
    %v2142 = vsel %vm2141, %v2137, inf
    %2143 = vmin.xlane.f32.xlu0 %v2142
    %v2144 = vpop.xlane.xlu0 %2143
    %v2145 = vcvt.f32.s32 %v2144
    %v2146 = vcvt.f32.s32 %v2140
    %v2147 = vshll.u32 %v2146, 16
    %v2148 = vadd.s32 %v2147, %v2145
    %v2149 = vand.u32 %v1370, 65535
    %v2150 = vshra.s32 %v1370, 16
    %v2151 = vcvt.s32.f32 %v2149
    %v2152 = vcvt.s32.f32 %v2150
    %2153 = vmin.xlane.f32.xlu0 %v2152
    %v2154 = vpop.xlane.xlu0 %2153
    %vm2155 = vcmp.eq.f32.partialorder %v2152, %v2154
    %v2156 = vsel %vm2155, %v2151, inf
    %2157 = vmin.xlane.f32.xlu0 %v2156
    %v2158 = vpop.xlane.xlu0 %2157
    %v2159 = vcvt.f32.s32 %v2158
    %v2160 = vcvt.f32.s32 %v2154
    %v2161 = vshll.u32 %v2160, 16
    %v2162 = vadd.s32 %v2161, %v2159
    %v2163 = vand.u32 %v1371, 65535
    %v2164 = vshra.s32 %v1371, 16
    %v2165 = vcvt.s32.f32 %v2163
    %v2166 = vcvt.s32.f32 %v2164
    %2167 = vmin.xlane.f32.xlu0 %v2166
    %v2168 = vpop.xlane.xlu0 %2167
    %vm2169 = vcmp.eq.f32.partialorder %v2166, %v2168
    %v2170 = vsel %vm2169, %v2165, inf
    %2171 = vmin.xlane.f32.xlu0 %v2170
    %v2172 = vpop.xlane.xlu0 %2171
    %v2173 = vcvt.f32.s32 %v2172
    %v2174 = vcvt.f32.s32 %v2168
    %v2175 = vshll.u32 %v2174, 16
    %v2176 = vadd.s32 %v2175, %v2173
    %v2177 = vand.u32 %v1372, 65535
    %v2178 = vshra.s32 %v1372, 16
    %v2179 = vcvt.s32.f32 %v2177
    %v2180 = vcvt.s32.f32 %v2178
    %2181 = vmin.xlane.f32.xlu0 %v2180
    %v2182 = vpop.xlane.xlu0 %2181
    %vm2183 = vcmp.eq.f32.partialorder %v2180, %v2182
    %v2184 = vsel %vm2183, %v2179, inf
    %2185 = vmin.xlane.f32.xlu0 %v2184
    %v2186 = vpop.xlane.xlu0 %2185
    %v2187 = vcvt.f32.s32 %v2186
    %v2188 = vcvt.f32.s32 %v2182
    %v2189 = vshll.u32 %v2188, 16
    %v2190 = vadd.s32 %v2189, %v2187
    %v2191 = vand.u32 %v1373, 65535
    %v2192 = vshra.s32 %v1373, 16
    %v2193 = vcvt.s32.f32 %v2191
    %v2194 = vcvt.s32.f32 %v2192
    %2195 = vmin.xlane.f32.xlu0 %v2194
    %v2196 = vpop.xlane.xlu0 %2195
    %vm2197 = vcmp.eq.f32.partialorder %v2194, %v2196
    %v2198 = vsel %vm2197, %v2193, inf
    %2199 = vmin.xlane.f32.xlu0 %v2198
    %v2200 = vpop.xlane.xlu0 %2199
    %v2201 = vcvt.f32.s32 %v2200
    %v2202 = vcvt.f32.s32 %v2196
    %v2203 = vshll.u32 %v2202, 16
    %v2204 = vadd.s32 %v2203, %v2201
    %v2205 = vand.u32 %v1374, 65535
    %v2206 = vshra.s32 %v1374, 16
    %v2207 = vcvt.s32.f32 %v2205
    %v2208 = vcvt.s32.f32 %v2206
    %2209 = vmin.xlane.f32.xlu0 %v2208
    %v2210 = vpop.xlane.xlu0 %2209
    %vm2211 = vcmp.eq.f32.partialorder %v2208, %v2210
    %v2212 = vsel %vm2211, %v2207, inf
    %2213 = vmin.xlane.f32.xlu0 %v2212
    %v2214 = vpop.xlane.xlu0 %2213
    %v2215 = vcvt.f32.s32 %v2214
    %v2216 = vcvt.f32.s32 %v2210
    %v2217 = vshll.u32 %v2216, 16
    %v2218 = vadd.s32 %v2217, %v2215
    %v2219 = vand.u32 %v1375, 65535
    %v2220 = vshra.s32 %v1375, 16
    %v2221 = vcvt.s32.f32 %v2219
    %v2222 = vcvt.s32.f32 %v2220
    %2223 = vmin.xlane.f32.xlu0 %v2222
    %v2224 = vpop.xlane.xlu0 %2223
    %vm2225 = vcmp.eq.f32.partialorder %v2222, %v2224
    %v2226 = vsel %vm2225, %v2221, inf
    %2227 = vmin.xlane.f32.xlu0 %v2226
    %v2228 = vpop.xlane.xlu0 %2227
    %v2229 = vcvt.f32.s32 %v2228
    %v2230 = vcvt.f32.s32 %v2224
    %v2231 = vshll.u32 %v2230, 16
    %v2232 = vadd.s32 %v2231, %v2229
    %v2233 = vand.u32 %v1376, 65535
    %v2234 = vshra.s32 %v1376, 16
    %v2235 = vcvt.s32.f32 %v2233
    %v2236 = vcvt.s32.f32 %v2234
    %2237 = vmin.xlane.f32.xlu0 %v2236
    %v2238 = vpop.xlane.xlu0 %2237
    %vm2239 = vcmp.eq.f32.partialorder %v2236, %v2238
    %v2240 = vsel %vm2239, %v2235, inf
    %2241 = vmin.xlane.f32.xlu0 %v2240
    %v2242 = vpop.xlane.xlu0 %2241
    %v2243 = vcvt.f32.s32 %v2242
    %v2244 = vcvt.f32.s32 %v2238
    %v2245 = vshll.u32 %v2244, 16
    %v2246 = vadd.s32 %v2245, %v2243
    %v2247 = vand.u32 %v1377, 65535
    %v2248 = vshra.s32 %v1377, 16
    %v2249 = vcvt.s32.f32 %v2247
    %v2250 = vcvt.s32.f32 %v2248
    %2251 = vmin.xlane.f32.xlu0 %v2250
    %v2252 = vpop.xlane.xlu0 %2251
    %vm2253 = vcmp.eq.f32.partialorder %v2250, %v2252
    %v2254 = vsel %vm2253, %v2249, inf
    %2255 = vmin.xlane.f32.xlu0 %v2254
    %v2256 = vpop.xlane.xlu0 %2255
    %v2257 = vcvt.f32.s32 %v2256
    %v2258 = vcvt.f32.s32 %v2252
    %v2259 = vshll.u32 %v2258, 16
    %v2260 = vadd.s32 %v2259, %v2257
    %v2261 = vand.u32 %v1378, 65535
    %v2262 = vshra.s32 %v1378, 16
    %v2263 = vcvt.s32.f32 %v2261
    %v2264 = vcvt.s32.f32 %v2262
    %2265 = vmin.xlane.f32.xlu0 %v2264
    %v2266 = vpop.xlane.xlu0 %2265
    %vm2267 = vcmp.eq.f32.partialorder %v2264, %v2266
    %v2268 = vsel %vm2267, %v2263, inf
    %2269 = vmin.xlane.f32.xlu0 %v2268
    %v2270 = vpop.xlane.xlu0 %2269
    %v2271 = vcvt.f32.s32 %v2270
    %v2272 = vcvt.f32.s32 %v2266
    %v2273 = vshll.u32 %v2272, 16
    %v2274 = vadd.s32 %v2273, %v2271
    %vm2275 = vcmp.eq.s32.totalorder %v1122, %v1392
    %vm2276 = vcmp.eq.s32.totalorder %v1122, %v1406
    %vm2277 = vcmp.eq.s32.totalorder %v1122, %v1420
    %vm2278 = vcmp.eq.s32.totalorder %v1122, %v1434
    %vm2279 = vcmp.eq.s32.totalorder %v1122, %v1448
    %vm2280 = vcmp.eq.s32.totalorder %v1122, %v1462
    %vm2281 = vcmp.eq.s32.totalorder %v1122, %v1476
    %vm2282 = vcmp.eq.s32.totalorder %v1122, %v1490
    %vm2283 = vcmp.eq.s32.totalorder %v1122, %v1504
    %vm2284 = vcmp.eq.s32.totalorder %v1122, %v1518
    %vm2285 = vcmp.eq.s32.totalorder %v1122, %v1532
    %vm2286 = vcmp.eq.s32.totalorder %v1122, %v1546
    %vm2287 = vcmp.eq.s32.totalorder %v1122, %v1560
    %vm2288 = vcmp.eq.s32.totalorder %v1122, %v1574
    %vm2289 = vcmp.eq.s32.totalorder %v1122, %v1588
    %vm2290 = vcmp.eq.s32.totalorder %v1122, %v1602
    %vm2291 = vcmp.eq.s32.totalorder %v1122, %v1616
    %vm2292 = vcmp.eq.s32.totalorder %v1122, %v1630
    %vm2293 = vcmp.eq.s32.totalorder %v1122, %v1644
    %vm2294 = vcmp.eq.s32.totalorder %v1122, %v1658
    %vm2295 = vcmp.eq.s32.totalorder %v1122, %v1672
    %vm2296 = vcmp.eq.s32.totalorder %v1122, %v1686
    %vm2297 = vcmp.eq.s32.totalorder %v1122, %v1700
    %vm2298 = vcmp.eq.s32.totalorder %v1122, %v1714
    %vm2299 = vcmp.eq.s32.totalorder %v1122, %v1728
    %vm2300 = vcmp.eq.s32.totalorder %v1122, %v1742
    %vm2301 = vcmp.eq.s32.totalorder %v1122, %v1756
    %vm2302 = vcmp.eq.s32.totalorder %v1122, %v1770
    %vm2303 = vcmp.eq.s32.totalorder %v1122, %v1784
    %vm2304 = vcmp.eq.s32.totalorder %v1122, %v1798
    %vm2305 = vcmp.eq.s32.totalorder %v1122, %v1812
    %vm2306 = vcmp.eq.s32.totalorder %v1122, %v1826
    %vm2307 = vcmp.eq.s32.totalorder %v1122, %v1840
    %vm2308 = vcmp.eq.s32.totalorder %v1122, %v1854
    %vm2309 = vcmp.eq.s32.totalorder %v1122, %v1868
    %vm2310 = vcmp.eq.s32.totalorder %v1122, %v1882
    %vm2311 = vcmp.eq.s32.totalorder %v1122, %v1896
    %vm2312 = vcmp.eq.s32.totalorder %v1122, %v1910
    %vm2313 = vcmp.eq.s32.totalorder %v1122, %v1924
    %vm2314 = vcmp.eq.s32.totalorder %v1122, %v1938
    %vm2315 = vcmp.eq.s32.totalorder %v1122, %v1952
    %vm2316 = vcmp.eq.s32.totalorder %v1122, %v1966
    %vm2317 = vcmp.eq.s32.totalorder %v1122, %v1980
    %vm2318 = vcmp.eq.s32.totalorder %v1122, %v1994
    %vm2319 = vcmp.eq.s32.totalorder %v1122, %v2008
    %vm2320 = vcmp.eq.s32.totalorder %v1122, %v2022
    %vm2321 = vcmp.eq.s32.totalorder %v1122, %v2036
    %vm2322 = vcmp.eq.s32.totalorder %v1122, %v2050
    %vm2323 = vcmp.eq.s32.totalorder %v1122, %v2064
    %vm2324 = vcmp.eq.s32.totalorder %v1122, %v2078
    %vm2325 = vcmp.eq.s32.totalorder %v1122, %v2092
    %vm2326 = vcmp.eq.s32.totalorder %v1122, %v2106
    %vm2327 = vcmp.eq.s32.totalorder %v1122, %v2120
    %vm2328 = vcmp.eq.s32.totalorder %v1122, %v2134
    %vm2329 = vcmp.eq.s32.totalorder %v1122, %v2148
    %vm2330 = vcmp.eq.s32.totalorder %v1122, %v2162
    %vm2331 = vcmp.eq.s32.totalorder %v1122, %v2176
    %vm2332 = vcmp.eq.s32.totalorder %v1122, %v2190
    %vm2333 = vcmp.eq.s32.totalorder %v1122, %v2204
    %vm2334 = vcmp.eq.s32.totalorder %v1122, %v2218
    %vm2335 = vcmp.eq.s32.totalorder %v1122, %v2232
    %vm2336 = vcmp.eq.s32.totalorder %v1122, %v2246
    %vm2337 = vcmp.eq.s32.totalorder %v1122, %v2260
    %vm2338 = vcmp.eq.s32.totalorder %v1122, %v2274
    %v2339 = vsel %vm2275, 1, 0
    %v2340 = vsel %vm2276, 1, 0
    %v2341 = vsel %vm2277, 1, 0
    %v2342 = vsel %vm2278, 1, 0
    %v2343 = vsel %vm2279, 1, 0
    %v2344 = vsel %vm2280, 1, 0
    %v2345 = vsel %vm2281, 1, 0
    %v2346 = vsel %vm2282, 1, 0
    %v2347 = vsel %vm2283, 1, 0
    %v2348 = vsel %vm2284, 1, 0
    %v2349 = vsel %vm2285, 1, 0
    %v2350 = vsel %vm2286, 1, 0
    %v2351 = vsel %vm2287, 1, 0
    %v2352 = vsel %vm2288, 1, 0
    %v2353 = vsel %vm2289, 1, 0
    %v2354 = vsel %vm2290, 1, 0
    %v2355 = vsel %vm2291, 1, 0
    %v2356 = vsel %vm2292, 1, 0
    %v2357 = vsel %vm2293, 1, 0
    %v2358 = vsel %vm2294, 1, 0
    %v2359 = vsel %vm2295, 1, 0
    %v2360 = vsel %vm2296, 1, 0
    %v2361 = vsel %vm2297, 1, 0
    %v2362 = vsel %vm2298, 1, 0
    %v2363 = vsel %vm2299, 1, 0
    %v2364 = vsel %vm2300, 1, 0
    %v2365 = vsel %vm2301, 1, 0
    %v2366 = vsel %vm2302, 1, 0
    %v2367 = vsel %vm2303, 1, 0
    %v2368 = vsel %vm2304, 1, 0
    %v2369 = vsel %vm2305, 1, 0
    %v2370 = vsel %vm2306, 1, 0
    %v2371 = vsel %vm2307, 1, 0
    %v2372 = vsel %vm2308, 1, 0
    %v2373 = vsel %vm2309, 1, 0
    %v2374 = vsel %vm2310, 1, 0
    %v2375 = vsel %vm2311, 1, 0
    %v2376 = vsel %vm2312, 1, 0
    %v2377 = vsel %vm2313, 1, 0
    %v2378 = vsel %vm2314, 1, 0
    %v2379 = vsel %vm2315, 1, 0
    %v2380 = vsel %vm2316, 1, 0
    %v2381 = vsel %vm2317, 1, 0
    %v2382 = vsel %vm2318, 1, 0
    %v2383 = vsel %vm2319, 1, 0
    %v2384 = vsel %vm2320, 1, 0
    %v2385 = vsel %vm2321, 1, 0
    %v2386 = vsel %vm2322, 1, 0
    %v2387 = vsel %vm2323, 1, 0
    %v2388 = vsel %vm2324, 1, 0
    %v2389 = vsel %vm2325, 1, 0
    %v2390 = vsel %vm2326, 1, 0
    %v2391 = vsel %vm2327, 1, 0
    %v2392 = vsel %vm2328, 1, 0
    %v2393 = vsel %vm2329, 1, 0
    %v2394 = vsel %vm2330, 1, 0
    %v2395 = vsel %vm2331, 1, 0
    %v2396 = vsel %vm2332, 1, 0
    %v2397 = vsel %vm2333, 1, 0
    %v2398 = vsel %vm2334, 1, 0
    %v2399 = vsel %vm2335, 1, 0
    %v2400 = vsel %vm2336, 1, 0
    %v2401 = vsel %vm2337, 1, 0
    %v2402 = vsel %vm2338, 1, 0
    %v2403 = vcvt.s32.f32 %v2339
    %v2404 = vcvt.s32.f32 %v2340
    %v2405 = vcvt.s32.f32 %v2341
    %v2406 = vcvt.s32.f32 %v2342
    %v2407 = vcvt.s32.f32 %v2343
    %v2408 = vcvt.s32.f32 %v2344
    %v2409 = vcvt.s32.f32 %v2345
    %v2410 = vcvt.s32.f32 %v2346
    %v2411 = vcvt.s32.f32 %v2347
    %v2412 = vcvt.s32.f32 %v2348
    %v2413 = vcvt.s32.f32 %v2349
    %v2414 = vcvt.s32.f32 %v2350
    %v2415 = vcvt.s32.f32 %v2351
    %v2416 = vcvt.s32.f32 %v2352
    %v2417 = vcvt.s32.f32 %v2353
    %v2418 = vcvt.s32.f32 %v2354
    %v2419 = vcvt.s32.f32 %v2355
    %v2420 = vcvt.s32.f32 %v2356
    %v2421 = vcvt.s32.f32 %v2357
    %v2422 = vcvt.s32.f32 %v2358
    %v2423 = vcvt.s32.f32 %v2359
    %v2424 = vcvt.s32.f32 %v2360
    %v2425 = vcvt.s32.f32 %v2361
    %v2426 = vcvt.s32.f32 %v2362
    %v2427 = vcvt.s32.f32 %v2363
    %v2428 = vcvt.s32.f32 %v2364
    %v2429 = vcvt.s32.f32 %v2365
    %v2430 = vcvt.s32.f32 %v2366
    %v2431 = vcvt.s32.f32 %v2367
    %v2432 = vcvt.s32.f32 %v2368
    %v2433 = vcvt.s32.f32 %v2369
    %v2434 = vcvt.s32.f32 %v2370
    %v2435 = vcvt.s32.f32 %v2371
    %v2436 = vcvt.s32.f32 %v2372
    %v2437 = vcvt.s32.f32 %v2373
    %v2438 = vcvt.s32.f32 %v2374
    %v2439 = vcvt.s32.f32 %v2375
    %v2440 = vcvt.s32.f32 %v2376
    %v2441 = vcvt.s32.f32 %v2377
    %v2442 = vcvt.s32.f32 %v2378
    %v2443 = vcvt.s32.f32 %v2379
    %v2444 = vcvt.s32.f32 %v2380
    %v2445 = vcvt.s32.f32 %v2381
    %v2446 = vcvt.s32.f32 %v2382
    %v2447 = vcvt.s32.f32 %v2383
    %v2448 = vcvt.s32.f32 %v2384
    %v2449 = vcvt.s32.f32 %v2385
    %v2450 = vcvt.s32.f32 %v2386
    %v2451 = vcvt.s32.f32 %v2387
    %v2452 = vcvt.s32.f32 %v2388
    %v2453 = vcvt.s32.f32 %v2389
    %v2454 = vcvt.s32.f32 %v2390
    %v2455 = vcvt.s32.f32 %v2391
    %v2456 = vcvt.s32.f32 %v2392
    %v2457 = vcvt.s32.f32 %v2393
    %v2458 = vcvt.s32.f32 %v2394
    %v2459 = vcvt.s32.f32 %v2395
    %v2460 = vcvt.s32.f32 %v2396
    %v2461 = vcvt.s32.f32 %v2397
    %v2462 = vcvt.s32.f32 %v2398
    %v2463 = vcvt.s32.f32 %v2399
    %v2464 = vcvt.s32.f32 %v2400
    %v2465 = vcvt.s32.f32 %v2401
    %v2466 = vcvt.s32.f32 %v2402
    %2467 = vst [vmem:[#allocation4] sm:$0xff] %v2403
    %2468 = vst [vmem:[#allocation4 + $0x8] sm:$0xff] %v2404
    %2469 = vst [vmem:[#allocation4 + $0x10] sm:$0xff] %v2405
    %2470 = vst [vmem:[#allocation4 + $0x18] sm:$0xff] %v2406
    %2471 = vst [vmem:[#allocation4 + $0x20] sm:$0xff] %v2407
    %2472 = vst [vmem:[#allocation4 + $0x28] sm:$0xff] %v2408
    %2473 = vst [vmem:[#allocation4 + $0x30] sm:$0xff] %v2409
    %2474 = vst [vmem:[#allocation4 + $0x38] sm:$0xff] %v2410
    %2475 = vst [vmem:[#allocation4 + $0x40] sm:$0xff] %v2411
    %2476 = vst [vmem:[#allocation4 + $0x48] sm:$0xff] %v2412
    %2477 = vst [vmem:[#allocation4 + $0x50] sm:$0xff] %v2413
    %2478 = vst [vmem:[#allocation4 + $0x58] sm:$0xff] %v2414
    %2479 = vst [vmem:[#allocation4 + $0x60] sm:$0xff] %v2415
    %2480 = vst [vmem:[#allocation4 + $0x68] sm:$0xff] %v2416
    %2481 = vst [vmem:[#allocation4 + $0x70] sm:$0xff] %v2417
    %2482 = vst [vmem:[#allocation4 + $0x78] sm:$0xff] %v2418
    %2483 = vst [vmem:[#allocation4 + $0x80] sm:$0xff] %v2419
    %2484 = vst [vmem:[#allocation4 + $0x88] sm:$0xff] %v2420
    %2485 = vst [vmem:[#allocation4 + $0x90] sm:$0xff] %v2421
    %2486 = vst [vmem:[#allocation4 + $0x98] sm:$0xff] %v2422
    %2487 = vst [vmem:[#allocation4 + $0xa0] sm:$0xff] %v2423
    %2488 = vst [vmem:[#allocation4 + $0xa8] sm:$0xff] %v2424
    %2489 = vst [vmem:[#allocation4 + $0xb0] sm:$0xff] %v2425
    %2490 = vst [vmem:[#allocation4 + $0xb8] sm:$0xff] %v2426
    %2491 = vst [vmem:[#allocation4 + $0xc0] sm:$0xff] %v2427
    %2492 = vst [vmem:[#allocation4 + $0xc8] sm:$0xff] %v2428
    %2493 = vst [vmem:[#allocation4 + $0xd0] sm:$0xff] %v2429
    %2494 = vst [vmem:[#allocation4 + $0xd8] sm:$0xff] %v2430
    %2495 = vst [vmem:[#allocation4 + $0xe0] sm:$0xff] %v2431
    %2496 = vst [vmem:[#allocation4 + $0xe8] sm:$0xff] %v2432
    %2497 = vst [vmem:[#allocation4 + $0xf0] sm:$0xff] %v2433
    %2498 = vst [vmem:[#allocation4 + $0xf8] sm:$0xff] %v2434
    %2499 = vst [vmem:[#allocation4 + $0x100] sm:$0xff] %v2435
    %2500 = vst [vmem:[#allocation4 + $0x108] sm:$0xff] %v2436
    %2501 = vst [vmem:[#allocation4 + $0x110] sm:$0xff] %v2437
    %2502 = vst [vmem:[#allocation4 + $0x118] sm:$0xff] %v2438
    %2503 = vst [vmem:[#allocation4 + $0x120] sm:$0xff] %v2439
    %2504 = vst [vmem:[#allocation4 + $0x128] sm:$0xff] %v2440
    %2505 = vst [vmem:[#allocation4 + $0x130] sm:$0xff] %v2441
    %2506 = vst [vmem:[#allocation4 + $0x138] sm:$0xff] %v2442
    %2507 = vst [vmem:[#allocation4 + $0x140] sm:$0xff] %v2443
    %2508 = vst [vmem:[#allocation4 + $0x148] sm:$0xff] %v2444
    %2509 = vst [vmem:[#allocation4 + $0x150] sm:$0xff] %v2445
    %2510 = vst [vmem:[#allocation4 + $0x158] sm:$0xff] %v2446
    %2511 = vst [vmem:[#allocation4 + $0x160] sm:$0xff] %v2447
    %2512 = vst [vmem:[#allocation4 + $0x168] sm:$0xff] %v2448
    %2513 = vst [vmem:[#allocation4 + $0x170] sm:$0xff] %v2449
    %2514 = vst [vmem:[#allocation4 + $0x178] sm:$0xff] %v2450
    %2515 = vst [vmem:[#allocation4 + $0x180] sm:$0xff] %v2451
    %2516 = vst [vmem:[#allocation4 + $0x188] sm:$0xff] %v2452
    %2517 = vst [vmem:[#allocation4 + $0x190] sm:$0xff] %v2453
    %2518 = vst [vmem:[#allocation4 + $0x198] sm:$0xff] %v2454
    %2519 = vst [vmem:[#allocation4 + $0x1a0] sm:$0xff] %v2455
    %2520 = vst [vmem:[#allocation4 + $0x1a8] sm:$0xff] %v2456
    %2521 = vst [vmem:[#allocation4 + $0x1b0] sm:$0xff] %v2457
    %2522 = vst [vmem:[#allocation4 + $0x1b8] sm:$0xff] %v2458
    %2523 = vst [vmem:[#allocation4 + $0x1c0] sm:$0xff] %v2459
    %2524 = vst [vmem:[#allocation4 + $0x1c8] sm:$0xff] %v2460
    %2525 = vst [vmem:[#allocation4 + $0x1d0] sm:$0xff] %v2461
    %2526 = vst [vmem:[#allocation4 + $0x1d8] sm:$0xff] %v2462
    %2527 = vst [vmem:[#allocation4 + $0x1e0] sm:$0xff] %v2463
    %2528 = vst [vmem:[#allocation4 + $0x1e8] sm:$0xff] %v2464
    %2529 = vst [vmem:[#allocation4 + $0x1f0] sm:$0xff] %v2465
    %2530 = vst [vmem:[#allocation4 + $0x1f8] sm:$0xff] %v2466
    %2531 = vmatprep.subr.mxu0 0.0
    %2532 = vmatpush1.xpose.msra.mxu0 %v2403
    %2533 = vmatprep.subr.mxu0 0.0
    %2534 = vmatpush1.xpose.msra.mxu0 %v2404
    %2535 = vmatprep.subr.mxu0 0.0
    %2536 = vmatpush1.xpose.msra.mxu0 %v2405
    %2537 = vmatprep.subr.mxu0 0.0
    %2538 = vmatpush1.xpose.msra.mxu0 %v2406
    %2539 = vmatprep.subr.mxu0 0.0
    %2540 = vmatpush1.xpose.msra.mxu0 %v2407
    %2541 = vmatprep.subr.mxu0 0.0
    %2542 = vmatpush1.xpose.msra.mxu0 %v2408
    %2543 = vmatprep.subr.mxu0 0.0
    %2544 = vmatpush1.xpose.msra.mxu0 %v2409
    %2545 = vmatprep.subr.mxu0 0.0
    %2546 = vmatpush1.xpose.msra.mxu0 %v2410
    %2547 = vmatprep.subr.mxu0 0.0
    %2548 = vmatpush1.xpose.msra.mxu0 %v2411
    %2549 = vmatprep.subr.mxu0 0.0
    %2550 = vmatpush1.xpose.msra.mxu0 %v2412
    %2551 = vmatprep.subr.mxu0 0.0
    %2552 = vmatpush1.xpose.msra.mxu0 %v2413
    %2553 = vmatprep.subr.mxu0 0.0
    %2554 = vmatpush1.xpose.msra.mxu0 %v2414
    %2555 = vmatprep.subr.mxu0 0.0
    %2556 = vmatpush1.xpose.msra.mxu0 %v2415
    %2557 = vmatprep.subr.mxu0 0.0
    %2558 = vmatpush1.xpose.msra.mxu0 %v2416
    %2559 = vmatprep.subr.mxu0 0.0
    %2560 = vmatpush1.xpose.msra.mxu0 %v2417
    %2561 = vmatprep.subr.mxu0 0.0
    %2562 = vmatpush1.xpose.msra.mxu0 %v2418
    %2563 = vmatprep.subr.mxu0 0.0
    %2564 = vmatpush1.xpose.msra.mxu0 %v2419
    %2565 = vmatprep.subr.mxu0 0.0
    %2566 = vmatpush1.xpose.msra.mxu0 %v2420
    %2567 = vmatprep.subr.mxu0 0.0
    %2568 = vmatpush1.xpose.msra.mxu0 %v2421
    %2569 = vmatprep.subr.mxu0 0.0
    %2570 = vmatpush1.xpose.msra.mxu0 %v2422
    %2571 = vmatprep.subr.mxu0 0.0
    %2572 = vmatpush1.xpose.msra.mxu0 %v2423
    %2573 = vmatprep.subr.mxu0 0.0
    %2574 = vmatpush1.xpose.msra.mxu0 %v2424
    %2575 = vmatprep.subr.mxu0 0.0
    %2576 = vmatpush1.xpose.msra.mxu0 %v2425
    %2577 = vmatprep.subr.mxu0 0.0
    %2578 = vmatpush1.xpose.msra.mxu0 %v2426
    %2579 = vmatprep.subr.mxu0 0.0
    %2580 = vmatpush1.xpose.msra.mxu0 %v2427
    %2581 = vmatprep.subr.mxu0 0.0
    %2582 = vmatpush1.xpose.msra.mxu0 %v2428
    %2583 = vmatprep.subr.mxu0 0.0
    %2584 = vmatpush1.xpose.msra.mxu0 %v2429
    %2585 = vmatprep.subr.mxu0 0.0
    %2586 = vmatpush1.xpose.msra.mxu0 %v2430
    %2587 = vmatprep.subr.mxu0 0.0
    %2588 = vmatpush1.xpose.msra.mxu0 %v2431
    %2589 = vmatprep.subr.mxu0 0.0
    %2590 = vmatpush1.xpose.msra.mxu0 %v2432
    %2591 = vmatprep.subr.mxu0 0.0
    %2592 = vmatpush1.xpose.msra.mxu0 %v2433
    %2593 = vmatprep.subr.mxu0 0.0
    %2594 = vmatpush1.xpose.msra.mxu0 %v2434
    %2595 = vmatprep.mubr.f32.mxu0 0.0
    %2596 = vmatmul.mubr.f32.gmra.mrb[0].mxu0 %v82
    %v2597 = vpop.f32.mrb[0].mxu0
    %v2598 = vadd.f32 0.0, %v2597
    %v2599 = vpop.f32.mrb[0].mxu0
    %v2600 = vadd.f32 0.0, %v2599
    %2601 = vdwg.mxu0
    %2602 = vmatprep.subr.mxu0 0.0
    %2603 = vmatpush1.xpose.msra.mxu0 %v2435
    %2604 = vmatprep.subr.mxu0 0.0
    %2605 = vmatpush1.xpose.msra.mxu0 %v2436
    %2606 = vmatprep.subr.mxu0 0.0
    %2607 = vmatpush1.xpose.msra.mxu0 %v2437
    %2608 = vmatprep.subr.mxu0 0.0
    %2609 = vmatpush1.xpose.msra.mxu0 %v2438
    %2610 = vmatprep.subr.mxu0 0.0
    %2611 = vmatpush1.xpose.msra.mxu0 %v2439
    %2612 = vmatprep.subr.mxu0 0.0
    %2613 = vmatpush1.xpose.msra.mxu0 %v2440
    %2614 = vmatprep.subr.mxu0 0.0
    %2615 = vmatpush1.xpose.msra.mxu0 %v2441
    %2616 = vmatprep.subr.mxu0 0.0
    %2617 = vmatpush1.xpose.msra.mxu0 %v2442
    %2618 = vmatprep.subr.mxu0 0.0
    %2619 = vmatpush1.xpose.msra.mxu0 %v2443
    %2620 = vmatprep.subr.mxu0 0.0
    %2621 = vmatpush1.xpose.msra.mxu0 %v2444
    %2622 = vmatprep.subr.mxu0 0.0
    %2623 = vmatpush1.xpose.msra.mxu0 %v2445
    %2624 = vmatprep.subr.mxu0 0.0
    %2625 = vmatpush1.xpose.msra.mxu0 %v2446
    %2626 = vmatprep.subr.mxu0 0.0
    %2627 = vmatpush1.xpose.msra.mxu0 %v2447
    %2628 = vmatprep.subr.mxu0 0.0
    %2629 = vmatpush1.xpose.msra.mxu0 %v2448
    %2630 = vmatprep.subr.mxu0 0.0
    %2631 = vmatpush1.xpose.msra.mxu0 %v2449
    %2632 = vmatprep.subr.mxu0 0.0
    %2633 = vmatpush1.xpose.msra.mxu0 %v2450
    %2634 = vmatprep.subr.mxu0 0.0
    %2635 = vmatpush1.xpose.msra.mxu0 %v2451
    %2636 = vmatprep.subr.mxu0 0.0
    %2637 = vmatpush1.xpose.msra.mxu0 %v2452
    %2638 = vmatprep.subr.mxu0 0.0
    %2639 = vmatpush1.xpose.msra.mxu0 %v2453
    %2640 = vmatprep.subr.mxu0 0.0
    %2641 = vmatpush1.xpose.msra.mxu0 %v2454
    %2642 = vmatprep.subr.mxu0 0.0
    %2643 = vmatpush1.xpose.msra.mxu0 %v2455
    %2644 = vmatprep.subr.mxu0 0.0
    %2645 = vmatpush1.xpose.msra.mxu0 %v2456
    %2646 = vmatprep.subr.mxu0 0.0
    %2647 = vmatpush1.xpose.msra.mxu0 %v2457
    %2648 = vmatprep.subr.mxu0 0.0
    %2649 = vmatpush1.xpose.msra.mxu0 %v2458
    %2650 = vmatprep.subr.mxu0 0.0
    %2651 = vmatpush1.xpose.msra.mxu0 %v2459
    %2652 = vmatprep.subr.mxu0 0.0
    %2653 = vmatpush1.xpose.msra.mxu0 %v2460
    %2654 = vmatprep.subr.mxu0 0.0
    %2655 = vmatpush1.xpose.msra.mxu0 %v2461
    %2656 = vmatprep.subr.mxu0 0.0
    %2657 = vmatpush1.xpose.msra.mxu0 %v2462
    %2658 = vmatprep.subr.mxu0 0.0
    %2659 = vmatpush1.xpose.msra.mxu0 %v2463
    %2660 = vmatprep.subr.mxu0 0.0
    %2661 = vmatpush1.xpose.msra.mxu0 %v2464
    %2662 = vmatprep.subr.mxu0 0.0
    %2663 = vmatpush1.xpose.msra.mxu0 %v2465
    %2664 = vmatprep.subr.mxu0 0.0
    %2665 = vmatpush1.xpose.msra.mxu0 %v2466
    %2666 = vmatprep.mubr.f32.mxu0 0.0
    %2667 = vmatmul.mubr.f32.gmra.mrb[0].mxu0 %v82
    %v2668 = vpop.f32.mrb[0].mxu0
    %v2669 = vadd.f32 0.0, %v2668
    %v2670 = vpop.f32.mrb[0].mxu0
    %v2671 = vadd.f32 0.0, %v2670
    %2672 = vdwg.mxu0
    %v2677 = vcombine.low %v2598, %v2600
    %v2678 = vcombine.low %v2669, %v2671
    %2681 = vst [vmem:[#allocation2] sm:$0xff] %v2677
    %2682 = vst [vmem:[#allocation2 + $0x8] sm:$0xff] %v2678
    %v2683 = vmax.f32 %v1124, 0.0
    %v2684 = vmax.f32 %v1126, 0.0
    %v2685 = vmax.f32 %v1128, 0.0
    %v2686 = vmax.f32 %v1130, 0.0
    %v2687 = vmax.f32 %v1132, 0.0
    %v2688 = vmax.f32 %v1134, 0.0
    %v2689 = vmax.f32 %v1136, 0.0
    %v2690 = vmax.f32 %v1138, 0.0
    %v2691 = vmax.f32 %v1140, 0.0
    %v2692 = vmax.f32 %v1142, 0.0
    %v2693 = vmax.f32 %v1144, 0.0
    %v2694 = vmax.f32 %v1146, 0.0
    %v2695 = vmax.f32 %v1148, 0.0
    %v2696 = vmax.f32 %v1150, 0.0
    %v2697 = vmax.f32 %v1152, 0.0
    %v2698 = vmax.f32 %v1154, 0.0
    %v2699 = vmax.f32 %v1156, 0.0
    %v2700 = vmax.f32 %v1158, 0.0
    %v2701 = vmax.f32 %v1160, 0.0
    %v2702 = vmax.f32 %v1162, 0.0
    %v2703 = vmax.f32 %v1164, 0.0
    %v2704 = vmax.f32 %v1166, 0.0
    %v2705 = vmax.f32 %v1168, 0.0
    %v2706 = vmax.f32 %v1170, 0.0
    %v2707 = vmax.f32 %v1172, 0.0
    %v2708 = vmax.f32 %v1174, 0.0
    %v2709 = vmax.f32 %v1176, 0.0
    %v2710 = vmax.f32 %v1178, 0.0
    %v2711 = vmax.f32 %v1180, 0.0
    %v2712 = vmax.f32 %v1182, 0.0
    %v2713 = vmax.f32 %v1184, 0.0
    %v2714 = vmax.f32 %v1186, 0.0
    %v2715 = vmax.f32 %v1188, 0.0
    %v2716 = vmax.f32 %v1190, 0.0
    %v2717 = vmax.f32 %v1192, 0.0
    %v2718 = vmax.f32 %v1194, 0.0
    %v2719 = vmax.f32 %v1196, 0.0
    %v2720 = vmax.f32 %v1198, 0.0
    %v2721 = vmax.f32 %v1200, 0.0
    %v2722 = vmax.f32 %v1202, 0.0
    %v2723 = vmax.f32 %v1204, 0.0
    %v2724 = vmax.f32 %v1206, 0.0
    %v2725 = vmax.f32 %v1208, 0.0
    %v2726 = vmax.f32 %v1210, 0.0
    %v2727 = vmax.f32 %v1212, 0.0
    %v2728 = vmax.f32 %v1214, 0.0
    %v2729 = vmax.f32 %v1216, 0.0
    %v2730 = vmax.f32 %v1218, 0.0
    %v2731 = vmax.f32 %v1220, 0.0
    %v2732 = vmax.f32 %v1222, 0.0
    %v2733 = vmax.f32 %v1224, 0.0
    %v2734 = vmax.f32 %v1226, 0.0
    %v2735 = vmax.f32 %v1228, 0.0
    %v2736 = vmax.f32 %v1230, 0.0
    %v2737 = vmax.f32 %v1232, 0.0
    %v2738 = vmax.f32 %v1234, 0.0
    %v2739 = vmax.f32 %v1236, 0.0
    %v2740 = vmax.f32 %v1238, 0.0
    %v2741 = vmax.f32 %v1240, 0.0
    %v2742 = vmax.f32 %v1242, 0.0
    %v2743 = vmax.f32 %v1244, 0.0
    %v2744 = vmax.f32 %v1246, 0.0
    %v2745 = vmax.f32 %v1248, 0.0
    %v2746 = vmax.f32 %v1250, 0.0
    %vm2747 = vcmask 7168
    %v2748 = vsel %vm2747, %v2683, 0.0
    %v2749 = vsel %vm2747, %v2684, 0.0
    %v2750 = vadd.f32 %v2748, %v2749
    %v2751 = vsel %vm2747, %v2685, 0.0
    %v2752 = vadd.f32 %v2750, %v2751
    %v2753 = vsel %vm2747, %v2686, 0.0
    %v2754 = vadd.f32 %v2752, %v2753
    %v2755 = vsel %vm2747, %v2687, 0.0
    %v2756 = vadd.f32 %v2754, %v2755
    %v2757 = vsel %vm2747, %v2688, 0.0
    %v2758 = vadd.f32 %v2756, %v2757
    %v2759 = vsel %vm2747, %v2689, 0.0
    %v2760 = vadd.f32 %v2758, %v2759
    %v2761 = vsel %vm2747, %v2690, 0.0
    %v2762 = vadd.f32 %v2760, %v2761
    %v2763 = vsel %vm2747, %v2691, 0.0
    %v2764 = vadd.f32 %v2762, %v2763
    %v2765 = vsel %vm2747, %v2692, 0.0
    %v2766 = vadd.f32 %v2764, %v2765
    %v2767 = vsel %vm2747, %v2693, 0.0
    %v2768 = vadd.f32 %v2766, %v2767
    %v2769 = vsel %vm2747, %v2694, 0.0
    %v2770 = vadd.f32 %v2768, %v2769
    %v2771 = vsel %vm2747, %v2695, 0.0
    %v2772 = vadd.f32 %v2770, %v2771
    %v2773 = vsel %vm2747, %v2696, 0.0
    %v2774 = vadd.f32 %v2772, %v2773
    %v2775 = vsel %vm2747, %v2697, 0.0
    %v2776 = vadd.f32 %v2774, %v2775
    %v2777 = vsel %vm2747, %v2698, 0.0
    %v2778 = vadd.f32 %v2776, %v2777
    %v2779 = vsel %vm2747, %v2699, 0.0
    %v2780 = vadd.f32 %v2778, %v2779
    %v2781 = vsel %vm2747, %v2700, 0.0
    %v2782 = vadd.f32 %v2780, %v2781
    %v2783 = vsel %vm2747, %v2701, 0.0
    %v2784 = vadd.f32 %v2782, %v2783
    %v2785 = vsel %vm2747, %v2702, 0.0
    %v2786 = vadd.f32 %v2784, %v2785
    %v2787 = vsel %vm2747, %v2703, 0.0
    %v2788 = vadd.f32 %v2786, %v2787
    %v2789 = vsel %vm2747, %v2704, 0.0
    %v2790 = vadd.f32 %v2788, %v2789
    %v2791 = vsel %vm2747, %v2705, 0.0
    %v2792 = vadd.f32 %v2790, %v2791
    %v2793 = vsel %vm2747, %v2706, 0.0
    %v2794 = vadd.f32 %v2792, %v2793
    %v2795 = vsel %vm2747, %v2707, 0.0
    %v2796 = vadd.f32 %v2794, %v2795
    %v2797 = vsel %vm2747, %v2708, 0.0
    %v2798 = vadd.f32 %v2796, %v2797
    %v2799 = vsel %vm2747, %v2709, 0.0
    %v2800 = vadd.f32 %v2798, %v2799
    %v2801 = vsel %vm2747, %v2710, 0.0
    %v2802 = vadd.f32 %v2800, %v2801
    %v2803 = vsel %vm2747, %v2711, 0.0
    %v2804 = vadd.f32 %v2802, %v2803
    %v2805 = vsel %vm2747, %v2712, 0.0
    %v2806 = vadd.f32 %v2804, %v2805
    %v2807 = vsel %vm2747, %v2713, 0.0
    %v2808 = vadd.f32 %v2806, %v2807
    %v2809 = vsel %vm2747, %v2714, 0.0
    %v2810 = vadd.f32 %v2808, %v2809
    %v2811 = vsel %vm2747, %v2715, 0.0
    %v2812 = vadd.f32 %v2810, %v2811
    %v2813 = vsel %vm2747, %v2716, 0.0
    %v2814 = vadd.f32 %v2812, %v2813
    %v2815 = vsel %vm2747, %v2717, 0.0
    %v2816 = vadd.f32 %v2814, %v2815
    %v2817 = vsel %vm2747, %v2718, 0.0
    %v2818 = vadd.f32 %v2816, %v2817
    %v2819 = vsel %vm2747, %v2719, 0.0
    %v2820 = vadd.f32 %v2818, %v2819
    %v2821 = vsel %vm2747, %v2720, 0.0
    %v2822 = vadd.f32 %v2820, %v2821
    %v2823 = vsel %vm2747, %v2721, 0.0
    %v2824 = vadd.f32 %v2822, %v2823
    %v2825 = vsel %vm2747, %v2722, 0.0
    %v2826 = vadd.f32 %v2824, %v2825
    %v2827 = vsel %vm2747, %v2723, 0.0
    %v2828 = vadd.f32 %v2826, %v2827
    %v2829 = vsel %vm2747, %v2724, 0.0
    %v2830 = vadd.f32 %v2828, %v2829
    %v2831 = vsel %vm2747, %v2725, 0.0
    %v2832 = vadd.f32 %v2830, %v2831
    %v2833 = vsel %vm2747, %v2726, 0.0
    %v2834 = vadd.f32 %v2832, %v2833
    %v2835 = vsel %vm2747, %v2727, 0.0
    %v2836 = vadd.f32 %v2834, %v2835
    %v2837 = vsel %vm2747, %v2728, 0.0
    %v2838 = vadd.f32 %v2836, %v2837
    %v2839 = vsel %vm2747, %v2729, 0.0
    %v2840 = vadd.f32 %v2838, %v2839
    %v2841 = vsel %vm2747, %v2730, 0.0
    %v2842 = vadd.f32 %v2840, %v2841
    %v2843 = vsel %vm2747, %v2731, 0.0
    %v2844 = vadd.f32 %v2842, %v2843
    %v2845 = vsel %vm2747, %v2732, 0.0
    %v2846 = vadd.f32 %v2844, %v2845
    %v2847 = vsel %vm2747, %v2733, 0.0
    %v2848 = vadd.f32 %v2846, %v2847
    %v2849 = vsel %vm2747, %v2734, 0.0
    %v2850 = vadd.f32 %v2848, %v2849
    %v2851 = vsel %vm2747, %v2735, 0.0
    %v2852 = vadd.f32 %v2850, %v2851
    %v2853 = vsel %vm2747, %v2736, 0.0
    %v2854 = vadd.f32 %v2852, %v2853
    %v2855 = vsel %vm2747, %v2737, 0.0
    %v2856 = vadd.f32 %v2854, %v2855
    %v2857 = vsel %vm2747, %v2738, 0.0
    %v2858 = vadd.f32 %v2856, %v2857
    %v2859 = vsel %vm2747, %v2739, 0.0
    %v2860 = vadd.f32 %v2858, %v2859
    %v2861 = vsel %vm2747, %v2740, 0.0
    %v2862 = vadd.f32 %v2860, %v2861
    %v2863 = vsel %vm2747, %v2741, 0.0
    %v2864 = vadd.f32 %v2862, %v2863
    %v2865 = vsel %vm2747, %v2742, 0.0
    %v2866 = vadd.f32 %v2864, %v2865
    %v2867 = vsel %vm2747, %v2743, 0.0
    %v2868 = vadd.f32 %v2866, %v2867
    %v2869 = vsel %vm2747, %v2744, 0.0
    %v2870 = vadd.f32 %v2868, %v2869
    %v2871 = vsel %vm2747, %v2745, 0.0
    %v2872 = vadd.f32 %v2870, %v2871
    %v2873 = vsel %vm2747, %v2746, 0.0
    %v2874 = vadd.f32 %v2872, %v2873
    %2875 = vadd.xlane.f32.xlu0 %v2874
    %v2876 = vpop.xlane.xlu0 %2875
    %v2877 = vrot.slane %v2876, 4
    %v2878 = vadd.f32 %v2876, %v2877
    %v2879 = vrot.slane %v2878, 2
    %v2880 = vadd.f32 %v2878, %v2879
    %v2881 = vrot.slane %v2880, 1
    %v2882 = vadd.f32 %v2880, %v2881
    %s2883 = vtos %v2882
    %v2884 = vstv %s2883
    %v2885 = vmul.f32 %v2884, 0.00012207031
    %vm2886 = vcmask 0
    %2887 = vst.msk [vmem:[#allocation6] sm:$0x1] %vm2886, %v2885
    %v2888 = vadd.f32 %v2403, %v2404
    %v2889 = vadd.f32 %v2888, %v2405
    %v2890 = vadd.f32 %v2889, %v2406
    %v2891 = vadd.f32 %v2890, %v2407
    %v2892 = vadd.f32 %v2891, %v2408
    %v2893 = vadd.f32 %v2892, %v2409
    %v2894 = vadd.f32 %v2893, %v2410
    %v2895 = vadd.f32 %v2894, %v2411
    %v2896 = vadd.f32 %v2895, %v2412
    %v2897 = vadd.f32 %v2896, %v2413
    %v2898 = vadd.f32 %v2897, %v2414
    %v2899 = vadd.f32 %v2898, %v2415
    %v2900 = vadd.f32 %v2899, %v2416
    %v2901 = vadd.f32 %v2900, %v2417
    %v2902 = vadd.f32 %v2901, %v2418
    %v2903 = vadd.f32 %v2902, %v2419
    %v2904 = vadd.f32 %v2903, %v2420
    %v2905 = vadd.f32 %v2904, %v2421
    %v2906 = vadd.f32 %v2905, %v2422
    %v2907 = vadd.f32 %v2906, %v2423
    %v2908 = vadd.f32 %v2907, %v2424
    %v2909 = vadd.f32 %v2908, %v2425
    %v2910 = vadd.f32 %v2909, %v2426
    %v2911 = vadd.f32 %v2910, %v2427
    %v2912 = vadd.f32 %v2911, %v2428
    %v2913 = vadd.f32 %v2912, %v2429
    %v2914 = vadd.f32 %v2913, %v2430
    %v2915 = vadd.f32 %v2914, %v2431
    %v2916 = vadd.f32 %v2915, %v2432
    %v2917 = vadd.f32 %v2916, %v2433
    %v2918 = vadd.f32 %v2917, %v2434
    %v2919 = vadd.f32 %v2918, %v2435
    %v2920 = vadd.f32 %v2919, %v2436
    %v2921 = vadd.f32 %v2920, %v2437
    %v2922 = vadd.f32 %v2921, %v2438
    %v2923 = vadd.f32 %v2922, %v2439
    %v2924 = vadd.f32 %v2923, %v2440
    %v2925 = vadd.f32 %v2924, %v2441
    %v2926 = vadd.f32 %v2925, %v2442
    %v2927 = vadd.f32 %v2926, %v2443
    %v2928 = vadd.f32 %v2927, %v2444
    %v2929 = vadd.f32 %v2928, %v2445
    %v2930 = vadd.f32 %v2929, %v2446
    %v2931 = vadd.f32 %v2930, %v2447
    %v2932 = vadd.f32 %v2931, %v2448
    %v2933 = vadd.f32 %v2932, %v2449
    %v2934 = vadd.f32 %v2933, %v2450
    %v2935 = vadd.f32 %v2934, %v2451
    %v2936 = vadd.f32 %v2935, %v2452
    %v2937 = vadd.f32 %v2936, %v2453
    %v2938 = vadd.f32 %v2937, %v2454
    %v2939 = vadd.f32 %v2938, %v2455
    %v2940 = vadd.f32 %v2939, %v2456
    %v2941 = vadd.f32 %v2940, %v2457
    %v2942 = vadd.f32 %v2941, %v2458
    %v2943 = vadd.f32 %v2942, %v2459
    %v2944 = vadd.f32 %v2943, %v2460
    %v2945 = vadd.f32 %v2944, %v2461
    %v2946 = vadd.f32 %v2945, %v2462
    %v2947 = vadd.f32 %v2946, %v2463
    %v2948 = vadd.f32 %v2947, %v2464
    %v2949 = vadd.f32 %v2948, %v2465
    %v2950 = vadd.f32 %v2949, %v2466
    %v2951 = vrot.slane %v2950, 4
    %v2952 = vadd.f32 %v2950, %v2951
    %v2953 = vrot.slane %v2952, 2
    %v2954 = vadd.f32 %v2952, %v2953
    %v2955 = vrot.slane %v2954, 1
    %v2956 = vadd.f32 %v2954, %v2955
    %v2957 = vmul.f32 %v2956, 0.001953125
    %v2958 = vadd.f32 %v2957, 1e-10
    %v2959 = vlog2.pop %v2958
    %v2960 = vmul.f32 %v2959, 0.6931472
    %v2961 = vmul.f32 %v2957, %v2960
    %vm2962 = vcmask 1040384
    %v2963 = vsel %vm2962, %v2961, 0.0
    %2964 = vadd.xlane.f32.xlu0 %v2963
    %v2965 = vpop.xlane.xlu0 %2964
    %v2966 = vrot.slane %v2965, 4
    %v2967 = vadd.f32 %v2965, %v2966
    %v2968 = vrot.slane %v2967, 2
    %v2969 = vadd.f32 %v2967, %v2968
    %v2970 = vrot.slane %v2969, 1
    %v2971 = vadd.f32 %v2969, %v2970
    %s2972 = vtos %v2971
    %v2973 = vstv %s2972
    %v2974 = vsub.f32 0.0, %v2973
    %2975 = vst.msk [vmem:[#allocation7] sm:$0x1] %vm2886, %v2974
    // Predicated region
    $region10: #{tpu_custom_call.1} parent=1 // pred_check
      _
    $region11: #{tpu_custom_call.1} parent=1 // pred_check_branch
      %2977 = sbr.rel (0) target = $region13
    $region12: #{tpu_custom_call.1} parent=1 // pred_region
      %s2979 = ssub.s32 256, 256
      %2980 = vsyncadd [#allocation3], %s2979
      %s2982 = sshll.u32 [#allocation2], 4
      %s2983 = int_to_ptr.vmem [resolvable:$true] %s2982
      %2985 = dma.vmem_to_hbm [thread:$0]  %s2983, 256, %s2, [#allocation3]
    $region13: #{tpu_custom_call.1} parent=1 // pred_fallthru
      _
    // Predicated region
    $region14: #{tpu_custom_call.1} parent=1 // pred_check
      _
    $region15: #{tpu_custom_call.1} parent=1 // pred_check_branch
      %2987 = sbr.rel (0) target = $region17
    $region16: #{tpu_custom_call.1} parent=1 // pred_region
      %s2989 = ssub.s32 8192, 8192
      %2990 = vsyncadd [#allocation5], %s2989
      %s2991 = sshll.u32 [#allocation4], 4
      %s2992 = int_to_ptr.vmem [resolvable:$true] %s2991
      %2997 = dma.vmem_to_hbm [thread:$0]  %s2992, 8192, %s3, [#allocation5], 128, 128, 8
    $region17: #{tpu_custom_call.1} parent=1 // pred_fallthru
      _
    // Predicated region
    $region18: #{tpu_custom_call.1} parent=1 // pred_check
      _
    $region19: #{tpu_custom_call.1} parent=1 // pred_check_branch
      %2999 = sbr.rel (0) target = $region21
    $region20: #{tpu_custom_call.1} parent=1 // pred_region
      %s3001 = ssub.s32 16, 16
      %3002 = vsyncadd [#allocation5], %s3001
      %s3004 = sshll.u32 [#allocation6], 4
      %s3005 = int_to_ptr.vmem [resolvable:$true] %s3004
      %3007 = dma.vmem_to_hbm [thread:$0]  %s3005, 16, %s4, [#allocation5]
    $region21: #{tpu_custom_call.1} parent=1 // pred_fallthru
      _
    // Predicated region
    $region22: #{tpu_custom_call.1} parent=1 // pred_check
      _
    $region23: #{tpu_custom_call.1} parent=1 // pred_check_branch
      %3009 = sbr.rel (0) target = $region25
    $region24: #{tpu_custom_call.1} parent=1 // pred_region
      %s3011 = ssub.s32 16, 16
      %3012 = vsyncadd [#allocation8], %s3011
      %s3014 = sshll.u32 [#allocation7], 4
      %s3015 = int_to_ptr.vmem [resolvable:$true] %s3014
      %3017 = dma.vmem_to_hbm [thread:$0]  %s3015, 16, %s5, [#allocation8]
    $region25: #{tpu_custom_call.1} parent=1 // pred_fallthru
      _
    // Predicated region
    $region26: #{tpu_custom_call.1} parent=1 // pred_check
      _
    $region27: #{tpu_custom_call.1} parent=1 // pred_check_branch
      %3019 = sbr.rel (0) target = $region29
    $region28: #{tpu_custom_call.1} parent=1 // pred_region
      %3020 = dma.done [#allocation3], 256
    $region29: #{tpu_custom_call.1} parent=1 // pred_fallthru
      _
    // Predicated region
    $region30: #{tpu_custom_call.1} parent=1 // pred_check
      _
    $region31: #{tpu_custom_call.1} parent=1 // pred_check_branch
      %3022 = sbr.rel (0) target = $region33
    $region32: #{tpu_custom_call.1} parent=1 // pred_region
      %3023 = dma.done [#allocation5], 8192
    $region33: #{tpu_custom_call.1} parent=1 // pred_fallthru
      _
    // Predicated region
    $region34: #{tpu_custom_call.1} parent=1 // pred_check
      _
    $region35: #{tpu_custom_call.1} parent=1 // pred_check_branch
      %3025 = sbr.rel (0) target = $region37
    $region36: #{tpu_custom_call.1} parent=1 // pred_region
      %3026 = dma.done [#allocation5], 16
    $region37: #{tpu_custom_call.1} parent=1 // pred_fallthru
      _
    // Predicated region
    $region38: #{tpu_custom_call.1} parent=1 // pred_check
      _
    $region39: #{tpu_custom_call.1} parent=1 // pred_check_branch
      %3028 = sbr.rel (0) target = $region41
    $region40: #{tpu_custom_call.1} parent=1 // pred_region
      %3029 = dma.done [#allocation8], 16
    $region41: #{tpu_custom_call.1} parent=1 // pred_fallthru
      _
    %3030 = vsyncpa [#allocation3], 1
    %3031 = vsyncpa [#allocation5], 1
    %3032 = vsyncpa [#allocation8], 1

</llo_original>
